<compile_context>
chip_gen: v7x
topology: tpu7x:2x2x1
jax: 0.10.0
libtpu: 0.0.40
codegen_flags: <defaults>
</compile_context>

<pallas_src>
import functools

import jax
import jax.numpy as jnp
from jax import lax
from jax.experimental import pallas as pl
from jax.experimental.pallas import tpu as pltpu

_LANE = 128
_SUBLANE = 8


def _round_up(x, m):
    return ((x + m - 1) // m) * m


def _lstm_mp_kernel(fmess_ref, gmat_ref, adj_ref,
                    w_all_x_ref, b_all_ref, w_iou_h_ref, w_f_h_ref,
                    h_out_ref, c_out_ref, *, depth, hp, k, mxu_dtype):
    Np = adj_ref.shape[0]
    Hp = hp
    K = k

    if depth == 0:
        h_out_ref[...] = jnp.zeros((Np, Hp), jnp.float32)
        c_out_ref[...] = jnp.zeros((Np, Hp), jnp.float32)
        return

    x = fmess_ref[...]                    # (Np, D)    mxu_dtype
    A = adj_ref[...]                      # (Np, Np)   adjacency (col 0 zeroed in wrapper)
    G = gmat_ref[...]                     # (K*Np, Np) one-hot gather matrix (col 0 zeroed)
    w_iou_h = w_iou_h_ref[...]            # (Hp, 3*Hp)
    w_f_h = w_f_h_ref[...]                # (Hp, Hp)

    # Fused depth-invariant input projections: one MXU pass over (D, 4*Hp).
    x_all = jnp.dot(x, w_all_x_ref[...],
                    preferred_element_type=jnp.float32) + b_all_ref[...]     # (Np, 4*Hp) f32
    x_iou = x_all[:, 0:3 * Hp]                                               # (Np, 3*Hp)
    x_f = x_all[:, 3 * Hp:4 * Hp]                                            # (Np, Hp)
    # Hoisted once (JAX does not CSE broadcasts): (K*Np, Hp) tiled f-gate input projection.
    x_f_tiled = jnp.concatenate([x_f] * K, axis=0)

    # ---- peeled step 0: h0 = c0 = 0 -> every recurrence matmul is zero, fc_sum = 0 --------
    i0 = jax.nn.sigmoid(x_iou[:, 0:Hp])
    o0 = jax.nn.sigmoid(x_iou[:, Hp:2 * Hp])
    u0 = jnp.tanh(x_iou[:, 2 * Hp:3 * Hp])
    c = i0 * u0
    h = o0 * jnp.tanh(c)

    def step(_, carry):
        h, c = carry
        h_mx = h.astype(mxu_dtype)
        # f-gate hidden projection BEFORE the gather -> K x fewer rows through the MXU.
        hW = jnp.dot(h_mx, w_f_h, preferred_element_type=jnp.float32)        # (Np, Hp)
        # Neighbour-sum of h as an adjacency matmul (replaces K-wide gather + reduce).
        h_sum = jnp.dot(A, h_mx, preferred_element_type=jnp.float32)         # (Np, Hp)
        # Two selection matmuls (no per-step concat copy on the serial chain).
        gat_hw = jnp.dot(G, hW.astype(mxu_dtype),
                         preferred_element_type=jnp.float32)                 # (K*Np, Hp)
        gat_c = jnp.dot(G, c.astype(mxu_dtype),
                        preferred_element_type=jnp.float32)                  # (K*Np, Hp)

        g = x_iou + jnp.dot(h_sum.astype(mxu_dtype), w_iou_h,
                            preferred_element_type=jnp.float32)              # (Np, 3*Hp)
        # Hp is a multiple of 128 -> every gate slice is lane-tile aligned (pure VPU/EUP).
        i_g = jax.nn.sigmoid(g[:, 0:Hp])
        o_g = jax.nn.sigmoid(g[:, Hp:2 * Hp])
        u_g = jnp.tanh(g[:, 2 * Hp:3 * Hp])

        # ONE fused sigmoid over the whole gathered block, then K-1 unrolled 2-D adds.
        f_all = jax.nn.sigmoid(x_f_tiled + gat_hw)                           # (K*Np, Hp)
        fc_all = f_all * gat_c                                               # (K*Np, Hp)
        fc = fc_all[0:Np, :]
        for kk in range(1, K):
            fc = fc + fc_all[kk * Np:(kk + 1) * Np, :]

        c_new = i_g * u_g + fc
        h_new = o_g * jnp.tanh(c_new)
        # TODO(synk): nn.Dropout(p=0.15) omitted (eval-mode identity; training RNG not reproduced).
        return h_new, c_new

    if depth > 1:
        n_steps = depth - 1
        unroll = True if n_steps <= 4 else 2
        h, c = lax.fori_loop(0, n_steps, step, (h, c), unroll=unroll)

    # Row-0 mask applied ONCE (col 0 of A/G is zeroed, so row 0 never leaked into other rows).
    row_ids = lax.broadcasted_iota(jnp.int32, (Np, 1), 0)
    mask = (row_ids != 0).astype(jnp.float32)
    h_out_ref[...] = h * mask
    c_out_ref[...] = c * mask


def lstm_forward_pallas(fmess, bgraph, params, depth, mxu_dtype=jnp.bfloat16):
    """Runs the full depth-step LSTM message passing in one Pallas kernel.

    mxu_dtype=jnp.bfloat16 casts MXU operands only (f32 accumulation, f32 gate math);
    mxu_dtype=jnp.float32 is bit-exact vs the f32 reference.
    """
    N, D = fmess.shape
    H = params["b_i"].shape[0]
    K = bgraph.shape[1]
    Np = _round_up(N, _SUBLANE)
    Hp = _round_up(H, _LANE)

    # --- one-hot gather / adjacency matrices (col 0 zeroed: row 0 never contributes) -------
    ids = bgraph.astype(jnp.int32)                                     # (N, K)
    cols = jnp.arange(Np, dtype=jnp.int32)[None, None, :]              # (1, 1, Np)
    onehot_nk = ((ids[:, :, None] == cols) & (cols != 0)).astype(jnp.float32)   # (N, K, Np)
    adj = jnp.pad(onehot_nk.sum(axis=1), ((0, Np - N), (0, 0)))        # (Np, Np)
    gmat = jnp.pad(jnp.transpose(onehot_nk, (1, 0, 2)),
                   ((0, 0), (0, Np - N), (0, 0))).reshape(K * Np, Np)  # (K*Np, Np), (k, n) order

    # --- weights: (fan_in, H) -> split x / h parts, pad H -> Hp, pack gates on output axis --
    def split_pad(w, b):
        wx = jnp.pad(w[:D], ((0, 0), (0, Hp - H)))                     # (D, Hp)
        wh = jnp.pad(w[D:], ((0, Hp - H), (0, Hp - H)))                # (Hp, Hp)
        bp = jnp.pad(b, (0, Hp - H))                                   # (Hp,)
        return wx, wh, bp

    wx_i, wh_i, bp_i = split_pad(params["W_i"], params["b_i"])
    wx_o, wh_o, bp_o = split_pad(params["W_o"], params["b_o"])
    wx_u, wh_u, bp_u = split_pad(params["W_u"], params["b_u"])
    wx_f, wh_f, bp_f = split_pad(params["W_f"], params["b_f"])

    w_all_x = jnp.concatenate([wx_i, wx_o, wx_u, wx_f], axis=1)        # (D, 4*Hp)  i|o|u|f
    b_all = jnp.concatenate([bp_i, bp_o, bp_u, bp_f])[None, :]         # (1, 4*Hp)  f32
    w_iou_h = jnp.concatenate([wh_i, wh_o, wh_u], axis=1)              # (Hp, 3*Hp)
    w_f_h = wh_f                                                       # (Hp, Hp)

    fmess_p = jnp.pad(fmess, ((0, Np - N), (0, 0)))                    # (Np, D)

    # MXU operands in mxu_dtype (0/1 one-hot & neighbour counts are exact in bf16);
    # biases stay f32 (added to f32 matmul accumulators).
    fmess_p = fmess_p.astype(mxu_dtype)
    gmat = gmat.astype(mxu_dtype)
    adj = adj.astype(mxu_dtype)
    w_all_x = w_all_x.astype(mxu_dtype)
    w_iou_h = w_iou_h.astype(mxu_dtype)
    w_f_h = w_f_h.astype(mxu_dtype)

    # Explicit VMEM budget (review: v7x only has 64 MiB physical VMEM).
    inputs = (fmess_p, gmat, adj, w_all_x, b_all, w_iou_h, w_f_h)
    nbytes = sum(a.size * a.dtype.itemsize for a in inputs)
    nbytes += 2 * Np * Hp * 4                    # f32 outputs
    nbytes += 8 * (K * Np) * Hp * 4              # in-kernel f32 temporaries (gathers, gates)
    vmem_limit = int(min(64 * 1024 * 1024, max(4 * 1024 * 1024, 2 * nbytes)))

    kernel = functools.partial(_lstm_mp_kernel, depth=depth, hp=Hp, k=K, mxu_dtype=mxu_dtype)
    vmem = pl.BlockSpec(memory_space=pltpu.MemorySpace.VMEM)
    h, c = pl.pallas_call(
        kernel,
        out_shape=(jax.ShapeDtypeStruct((Np, Hp), jnp.float32),
                   jax.ShapeDtypeStruct((Np, Hp), jnp.float32)),
        in_specs=[vmem] * len(inputs),
        out_specs=(vmem, vmem),
        compiler_params=pltpu.CompilerParams(vmem_limit_bytes=vmem_limit),
    )(*inputs)
    return h[:N, :H], c[:N, :H]


def lstm_forward_ref(fmess, bgraph, params, depth):
    """Pure-JAX reference mirroring the PyTorch forward exactly (eval-mode dropout)."""
    N, D = fmess.shape
    H = params["b_i"].shape[0]
    K = bgraph.shape[1]
    h = jnp.zeros((N, H), jnp.float32)
    c = jnp.zeros((N, H), jnp.float32)
    mask = jnp.ones((N, 1), jnp.float32).at[0, 0].set(0.0)
    for _ in range(depth):
        h_nei = h[bgraph]                      # (N, K, H)
        c_nei = c[bgraph]
        h_sum = h_nei.sum(axis=1)
        x_exp = jnp.broadcast_to(fmess[:, None, :], (N, K, D))
        cat_xh = jnp.concatenate([fmess, h_sum], axis=-1)
        i = jax.nn.sigmoid(cat_xh @ params["W_i"] + params["b_i"])
        o = jax.nn.sigmoid(cat_xh @ params["W_o"] + params["b_o"])
        u = jnp.tanh(cat_xh @ params["W_u"] + params["b_u"])
        f = jax.nn.sigmoid(jnp.concatenate([x_exp, h_nei], axis=-1) @ params["W_f"]
                           + params["b_f"])
        c = i * u + (f * c_nei).sum(axis=1)
        h = o * jnp.tanh(c)
        h = h * mask
        c = c * mask
    return h, c


def init_params(key, input_size, hsize):
    keys = jax.random.split(key, 8)
    fan_in = input_size + hsize
    bound = 1.0 / (fan_in ** 0.5)

    def lin(kw, kb):
        w = jax.random.uniform(kw, (fan_in, hsize), jnp.float32, -bound, bound)
        b = jax.random.uniform(kb, (hsize,), jnp.float32, -bound, bound)
        return w, b

    W_i, b_i = lin(keys[0], keys[1])
    W_o, b_o = lin(keys[2], keys[3])
    W_f, b_f = lin(keys[4], keys[5])
    W_u, b_u = lin(keys[6], keys[7])
    return dict(W_i=W_i, b_i=b_i, W_o=W_o, b_o=b_o,
                W_f=W_f, b_f=b_f, W_u=W_u, b_u=b_u)


if __name__ == "__main__":
    N, K, D, H, DEPTH = 16, 4, 32, 32, 3   # messages, max neighbours, input size, hidden size, depth

    key = jax.random.PRNGKey(0)
    k_f, k_g, k_p = jax.random.split(key, 3)
    fmess = jax.random.normal(k_f, (N, D), jnp.float32)
    bgraph = jax.random.randint(k_g, (N, K), 0, N, jnp.int32)
    params = init_params(k_p, D, H)

    h_r, c_r = lstm_forward_ref(fmess, bgraph, params, DEPTH)

    # 1) Exactness check: f32 MXU path matches the f32 PyTorch-equivalent reference.
    h_k, c_k = lstm_forward_pallas(fmess, bgraph, params, DEPTH, mxu_dtype=jnp.float32)
    jax.block_until_ready((h_k, c_k))
    assert h_k.shape == (N, H) and c_k.shape == (N, H)
    assert jnp.allclose(h_k, h_r, atol=1e-4, rtol=1e-4), "h mismatch (f32 path)"
    assert jnp.allclose(c_k, c_r, atol=1e-4, rtol=1e-4), "c mismatch (f32 path)"

    # 2) Optimized path: bf16 MXU operands (v6e/v7x native). Algorithmic correctness is proven
    #    by the f32 check above; the bf16 delta is pure operand-truncation, so the tolerance
    #    is relaxed per the review.
    h_b, c_b = lstm_forward_pallas(fmess, bgraph, params, DEPTH, mxu_dtype=jnp.bfloat16)
    jax.block_until_ready((h_b, c_b))
    assert jnp.all(jnp.isfinite(h_b)) and jnp.all(jnp.isfinite(c_b))
    assert jnp.allclose(h_b, h_r, atol=1e-1, rtol=1e-1), "h mismatch (bf16 path)"
    assert jnp.allclose(c_b, c_r, atol=1e-1, rtol=1e-1), "c mismatch (bf16 path)"

    print("KERNEL_OK")
</pallas_src>

<mosaic_0001>
module attributes {stable_mosaic.version = 11 : i64} {
  func.func @_lstm_mp_kernel(%arg0: memref<16x32xf32, #tpu.memory_space<vmem>>, %arg1: memref<64x16xf32, #tpu.memory_space<vmem>>, %arg2: memref<16x16xf32, #tpu.memory_space<vmem>>, %arg3: memref<32x512xf32, #tpu.memory_space<vmem>>, %arg4: memref<1x512xf32, #tpu.memory_space<vmem>>, %arg5: memref<128x384xf32, #tpu.memory_space<vmem>>, %arg6: memref<128x128xf32, #tpu.memory_space<vmem>>, %arg7: memref<16x128xf32, #tpu.memory_space<vmem>>, %arg8: memref<16x128xf32, #tpu.memory_space<vmem>>) attributes {dimension_semantics = [], scalar_prefetch = 0 : i64, scratch_operands = 0 : i64, tpu.core_type = #tpu.core_type<tc>} {
    %c0 = arith.constant 0 : index
    %c0_0 = arith.constant 0 : index
    %0 = vector.load %arg0[%c0, %c0_0] : memref<16x32xf32, #tpu.memory_space<vmem>>, vector<16x32xf32>
    %c0_1 = arith.constant 0 : index
    %c0_2 = arith.constant 0 : index
    %1 = vector.load %arg2[%c0_1, %c0_2] : memref<16x16xf32, #tpu.memory_space<vmem>>, vector<16x16xf32>
    %c0_3 = arith.constant 0 : index
    %c0_4 = arith.constant 0 : index
    %2 = vector.load %arg1[%c0_3, %c0_4] : memref<64x16xf32, #tpu.memory_space<vmem>>, vector<64x16xf32>
    %c0_5 = arith.constant 0 : index
    %c0_6 = arith.constant 0 : index
    %3 = vector.load %arg5[%c0_5, %c0_6] : memref<128x384xf32, #tpu.memory_space<vmem>>, vector<128x384xf32>
    %c0_7 = arith.constant 0 : index
    %c0_8 = arith.constant 0 : index
    %4 = vector.load %arg6[%c0_7, %c0_8] : memref<128x128xf32, #tpu.memory_space<vmem>>, vector<128x128xf32>
    %c0_9 = arith.constant 0 : index
    %c0_10 = arith.constant 0 : index
    %5 = vector.load %arg3[%c0_9, %c0_10] : memref<32x512xf32, #tpu.memory_space<vmem>>, vector<32x512xf32>
    %cst = arith.constant dense<0.000000e+00> : vector<16x512xf32>
    %6 = tpu.matmul %0, %5, %cst {dimension_numbers = #tpu.dot_dimension_numbers<[1], [0], [0], [1], [0, 0, 1, 1], [], []>} : vector<16x32xf32>, vector<32x512xf32>, vector<16x512xf32> -> vector<16x512xf32>
    %c0_11 = arith.constant 0 : index
    %c0_12 = arith.constant 0 : index
    %7 = vector.load %arg4[%c0_11, %c0_12] : memref<1x512xf32, #tpu.memory_space<vmem>>, vector<1x512xf32>
    %8 = vector.broadcast %7 : vector<1x512xf32> to vector<16x512xf32>
    %9 = arith.addf %6, %8 : vector<16x512xf32>
    %10 = vector.extract_strided_slice %9 {offsets = [0, 0], sizes = [16, 384], strides = [1, 1]} : vector<16x512xf32> to vector<16x384xf32>
    %11 = vector.extract_strided_slice %9 {offsets = [0, 384], sizes = [16, 128], strides = [1, 1]} : vector<16x512xf32> to vector<16x128xf32>
    %12 = tpu.concatenate %11, %11, %11, %11 in 0 : vector<16x128xf32>, vector<16x128xf32>, vector<16x128xf32>, vector<16x128xf32> -> vector<64x128xf32>
    %13 = vector.extract_strided_slice %10 {offsets = [0, 0], sizes = [16, 128], strides = [1, 1]} : vector<16x384xf32> to vector<16x128xf32>
    %14 = arith.negf %13 : vector<16x128xf32>
    %15 = math.exp %14 : vector<16x128xf32>
    %cst_13 = arith.constant 1.000000e+00 : f32
    %16 = vector.broadcast %cst_13 : f32 to vector<16x128xf32>
    %17 = arith.addf %16, %15 : vector<16x128xf32>
    %18 = arith.divf %16, %17 : vector<16x128xf32>
    %19 = vector.extract_strided_slice %10 {offsets = [0, 128], sizes = [16, 128], strides = [1, 1]} : vector<16x384xf32> to vector<16x128xf32>
    %20 = arith.negf %19 : vector<16x128xf32>
    %21 = math.exp %20 : vector<16x128xf32>
    %cst_14 = arith.constant 1.000000e+00 : f32
    %22 = vector.broadcast %cst_14 : f32 to vector<16x128xf32>
    %23 = arith.addf %22, %21 : vector<16x128xf32>
    %24 = arith.divf %22, %23 : vector<16x128xf32>
    %25 = vector.extract_strided_slice %10 {offsets = [0, 256], sizes = [16, 128], strides = [1, 1]} : vector<16x384xf32> to vector<16x128xf32>
    %26 = math.tanh %25 : vector<16x128xf32>
    %27 = arith.mulf %18, %26 : vector<16x128xf32>
    %28 = math.tanh %27 : vector<16x128xf32>
    %29 = arith.mulf %24, %28 : vector<16x128xf32>
    %c0_i32 = arith.constant 0 : i32
    %cst_15 = arith.constant dense<0.000000e+00> : vector<16x128xf32>
    %30 = tpu.matmul %29, %4, %cst_15 {dimension_numbers = #tpu.dot_dimension_numbers<[1], [0], [0], [1], [0, 0, 1, 1], [], []>} : vector<16x128xf32>, vector<128x128xf32>, vector<16x128xf32> -> vector<16x128xf32>
    %cst_16 = arith.constant dense<0.000000e+00> : vector<16x128xf32>
    %31 = tpu.matmul %1, %29, %cst_16 {dimension_numbers = #tpu.dot_dimension_numbers<[1], [0], [0], [1], [0, 0, 1, 1], [], []>} : vector<16x16xf32>, vector<16x128xf32>, vector<16x128xf32> -> vector<16x128xf32>
    %cst_17 = arith.constant dense<0.000000e+00> : vector<64x128xf32>
    %32 = tpu.matmul %2, %30, %cst_17 {dimension_numbers = #tpu.dot_dimension_numbers<[1], [0], [0], [1], [0, 0, 1, 1], [], []>} : vector<64x16xf32>, vector<16x128xf32>, vector<64x128xf32> -> vector<64x128xf32>
    %cst_18 = arith.constant dense<0.000000e+00> : vector<64x128xf32>
    %33 = tpu.matmul %2, %27, %cst_18 {dimension_numbers = #tpu.dot_dimension_numbers<[1], [0], [0], [1], [0, 0, 1, 1], [], []>} : vector<64x16xf32>, vector<16x128xf32>, vector<64x128xf32> -> vector<64x128xf32>
    %cst_19 = arith.constant dense<0.000000e+00> : vector<16x384xf32>
    %34 = tpu.matmul %31, %3, %cst_19 {dimension_numbers = #tpu.dot_dimension_numbers<[1], [0], [0], [1], [0, 0, 1, 1], [], []>} : vector<16x128xf32>, vector<128x384xf32>, vector<16x384xf32> -> vector<16x384xf32>
    %35 = arith.addf %10, %34 : vector<16x384xf32>
    %36 = vector.extract_strided_slice %35 {offsets = [0, 0], sizes = [16, 128], strides = [1, 1]} : vector<16x384xf32> to vector<16x128xf32>
    %37 = arith.negf %36 : vector<16x128xf32>
    %38 = math.exp %37 : vector<16x128xf32>
    %cst_20 = arith.constant 1.000000e+00 : f32
    %39 = vector.broadcast %cst_20 : f32 to vector<16x128xf32>
    %40 = arith.addf %39, %38 : vector<16x128xf32>
    %41 = arith.divf %39, %40 : vector<16x128xf32>
    %42 = vector.extract_strided_slice %35 {offsets = [0, 128], sizes = [16, 128], strides = [1, 1]} : vector<16x384xf32> to vector<16x128xf32>
    %43 = arith.negf %42 : vector<16x128xf32>
    %44 = math.exp %43 : vector<16x128xf32>
    %cst_21 = arith.constant 1.000000e+00 : f32
    %45 = vector.broadcast %cst_21 : f32 to vector<16x128xf32>
    %46 = arith.addf %45, %44 : vector<16x128xf32>
    %47 = arith.divf %45, %46 : vector<16x128xf32>
    %48 = vector.extract_strided_slice %35 {offsets = [0, 256], sizes = [16, 128], strides = [1, 1]} : vector<16x384xf32> to vector<16x128xf32>
    %49 = math.tanh %48 : vector<16x128xf32>
    %50 = arith.addf %12, %32 : vector<64x128xf32>
    %51 = arith.negf %50 : vector<64x128xf32>
    %52 = math.exp %51 : vector<64x128xf32>
    %cst_22 = arith.constant 1.000000e+00 : f32
    %53 = vector.broadcast %cst_22 : f32 to vector<64x128xf32>
    %54 = arith.addf %53, %52 : vector<64x128xf32>
    %55 = arith.divf %53, %54 : vector<64x128xf32>
    %56 = arith.mulf %55, %33 : vector<64x128xf32>
    %57 = vector.extract_strided_slice %56 {offsets = [0, 0], sizes = [16, 128], strides = [1, 1]} : vector<64x128xf32> to vector<16x128xf32>
    %58 = vector.extract_strided_slice %56 {offsets = [16, 0], sizes = [16, 128], strides = [1, 1]} : vector<64x128xf32> to vector<16x128xf32>
    %59 = arith.addf %57, %58 : vector<16x128xf32>
    %60 = vector.extract_strided_slice %56 {offsets = [32, 0], sizes = [16, 128], strides = [1, 1]} : vector<64x128xf32> to vector<16x128xf32>
    %61 = arith.addf %59, %60 : vector<16x128xf32>
    %62 = vector.extract_strided_slice %56 {offsets = [48, 0], sizes = [16, 128], strides = [1, 1]} : vector<64x128xf32> to vector<16x128xf32>
    %63 = arith.addf %61, %62 : vector<16x128xf32>
    %64 = arith.mulf %41, %49 : vector<16x128xf32>
    %65 = arith.addf %64, %63 : vector<16x128xf32>
    %66 = math.tanh %65 : vector<16x128xf32>
    %67 = arith.mulf %47, %66 : vector<16x128xf32>
    %c1_i32 = arith.constant 1 : i32
    %cst_23 = arith.constant dense<0.000000e+00> : vector<16x128xf32>
    %68 = tpu.matmul %67, %4, %cst_23 {dimension_numbers = #tpu.dot_dimension_numbers<[1], [0], [0], [1], [0, 0, 1, 1], [], []>} : vector<16x128xf32>, vector<128x128xf32>, vector<16x128xf32> -> vector<16x128xf32>
    %cst_24 = arith.constant dense<0.000000e+00> : vector<16x128xf32>
    %69 = tpu.matmul %1, %67, %cst_24 {dimension_numbers = #tpu.dot_dimension_numbers<[1], [0], [0], [1], [0, 0, 1, 1], [], []>} : vector<16x16xf32>, vector<16x128xf32>, vector<16x128xf32> -> vector<16x128xf32>
    %cst_25 = arith.constant dense<0.000000e+00> : vector<64x128xf32>
    %70 = tpu.matmul %2, %68, %cst_25 {dimension_numbers = #tpu.dot_dimension_numbers<[1], [0], [0], [1], [0, 0, 1, 1], [], []>} : vector<64x16xf32>, vector<16x128xf32>, vector<64x128xf32> -> vector<64x128xf32>
    %cst_26 = arith.constant dense<0.000000e+00> : vector<64x128xf32>
    %71 = tpu.matmul %2, %65, %cst_26 {dimension_numbers = #tpu.dot_dimension_numbers<[1], [0], [0], [1], [0, 0, 1, 1], [], []>} : vector<64x16xf32>, vector<16x128xf32>, vector<64x128xf32> -> vector<64x128xf32>
    %cst_27 = arith.constant dense<0.000000e+00> : vector<16x384xf32>
    %72 = tpu.matmul %69, %3, %cst_27 {dimension_numbers = #tpu.dot_dimension_numbers<[1], [0], [0], [1], [0, 0, 1, 1], [], []>} : vector<16x128xf32>, vector<128x384xf32>, vector<16x384xf32> -> vector<16x384xf32>
    %73 = arith.addf %10, %72 : vector<16x384xf32>
    %74 = vector.extract_strided_slice %73 {offsets = [0, 0], sizes = [16, 128], strides = [1, 1]} : vector<16x384xf32> to vector<16x128xf32>
    %75 = arith.negf %74 : vector<16x128xf32>
    %76 = math.exp %75 : vector<16x128xf32>
    %cst_28 = arith.constant 1.000000e+00 : f32
    %77 = vector.broadcast %cst_28 : f32 to vector<16x128xf32>
    %78 = arith.addf %77, %76 : vector<16x128xf32>
    %79 = arith.divf %77, %78 : vector<16x128xf32>
    %80 = vector.extract_strided_slice %73 {offsets = [0, 128], sizes = [16, 128], strides = [1, 1]} : vector<16x384xf32> to vector<16x128xf32>
    %81 = arith.negf %80 : vector<16x128xf32>
    %82 = math.exp %81 : vector<16x128xf32>
    %cst_29 = arith.constant 1.000000e+00 : f32
    %83 = vector.broadcast %cst_29 : f32 to vector<16x128xf32>
    %84 = arith.addf %83, %82 : vector<16x128xf32>
    %85 = arith.divf %83, %84 : vector<16x128xf32>
    %86 = vector.extract_strided_slice %73 {offsets = [0, 256], sizes = [16, 128], strides = [1, 1]} : vector<16x384xf32> to vector<16x128xf32>
    %87 = math.tanh %86 : vector<16x128xf32>
    %88 = arith.addf %12, %70 : vector<64x128xf32>
    %89 = arith.negf %88 : vector<64x128xf32>
    %90 = math.exp %89 : vector<64x128xf32>
    %cst_30 = arith.constant 1.000000e+00 : f32
    %91 = vector.broadcast %cst_30 : f32 to vector<64x128xf32>
    %92 = arith.addf %91, %90 : vector<64x128xf32>
    %93 = arith.divf %91, %92 : vector<64x128xf32>
    %94 = arith.mulf %93, %71 : vector<64x128xf32>
    %95 = vector.extract_strided_slice %94 {offsets = [0, 0], sizes = [16, 128], strides = [1, 1]} : vector<64x128xf32> to vector<16x128xf32>
    %96 = vector.extract_strided_slice %94 {offsets = [16, 0], sizes = [16, 128], strides = [1, 1]} : vector<64x128xf32> to vector<16x128xf32>
    %97 = arith.addf %95, %96 : vector<16x128xf32>
    %98 = vector.extract_strided_slice %94 {offsets = [32, 0], sizes = [16, 128], strides = [1, 1]} : vector<64x128xf32> to vector<16x128xf32>
    %99 = arith.addf %97, %98 : vector<16x128xf32>
    %100 = vector.extract_strided_slice %94 {offsets = [48, 0], sizes = [16, 128], strides = [1, 1]} : vector<64x128xf32> to vector<16x128xf32>
    %101 = arith.addf %99, %100 : vector<16x128xf32>
    %102 = arith.mulf %79, %87 : vector<16x128xf32>
    %103 = arith.addf %102, %101 : vector<16x128xf32>
    %104 = math.tanh %103 : vector<16x128xf32>
    %105 = arith.mulf %85, %104 : vector<16x128xf32>
    %106 = tpu.iota {dimensions = array<i32: 0>} : vector<16x1xi32>
    %c0_i32_31 = arith.constant 0 : i32
    %107 = vector.broadcast %c0_i32_31 : i32 to vector<16x1xi32>
    %108 = arith.cmpi ne, %106, %107 : vector<16x1xi32>
    %109 = arith.extui %108 : vector<16x1xi1> to vector<16x1xi32>
    %110 = arith.sitofp %109 : vector<16x1xi32> to vector<16x1xf32>
    %111 = vector.broadcast %110 : vector<16x1xf32> to vector<16x128xf32>
    %112 = arith.mulf %105, %111 : vector<16x128xf32>
    %c0_32 = arith.constant 0 : index
    %c0_33 = arith.constant 0 : index
    %113 = vector.load %arg7[%c0_32, %c0_33] : memref<16x128xf32, #tpu.memory_space<vmem>>, vector<16x128xf32>
    tpu.vector_store %arg7[%c0_32, %c0_33], %112 {strides = array<i32>} : memref<16x128xf32, #tpu.memory_space<vmem>>, vector<16x128xf32>,
    %114 = vector.broadcast %110 : vector<16x1xf32> to vector<16x128xf32>
    %115 = arith.mulf %103, %114 : vector<16x128xf32>
    %c0_34 = arith.constant 0 : index
    %c0_35 = arith.constant 0 : index
    %116 = vector.load %arg8[%c0_34, %c0_35] : memref<16x128xf32, #tpu.memory_space<vmem>>, vector<16x128xf32>
    tpu.vector_store %arg8[%c0_34, %c0_35], %115 {strides = array<i32>} : memref<16x128xf32, #tpu.memory_space<vmem>>, vector<16x128xf32>,
    return
  }
}

</mosaic_0001>

<llo_original>
// kernel: tpu_custom_call.1
$region0: #{tpu_custom_call.1}
  #allocation0 [shape = 'u32[]', space=smem, size = 0x4, offset = 0x4, fixed_abs, tag = 'smem constant byte address 0x4 - core index']
  #allocation1 [shape = 'u32[144,128]{1,0:T(1,128)}', space=vmem, size = 0x12000, scoped, tag = 'internal scratch']
  %s0 = inlined_call_operand.vmem [shape: f32[16,32], index: 0, kind: input, shape index: {}]
  %s1 = inlined_call_operand.vmem [shape: f32[64,16], index: 1, kind: input, shape index: {}]
  %s2 = inlined_call_operand.vmem [shape: f32[16,16], index: 2, kind: input, shape index: {}]
  %s3 = inlined_call_operand.hbm [shape: f32[32,512], index: 3, kind: input, shape index: {}]
  %s4 = inlined_call_operand.vmem [shape: f32[1,512], index: 4, kind: input, shape index: {}]
  %s5 = inlined_call_operand.hbm [shape: f32[128,384], index: 5, kind: input, shape index: {}]
  %s6 = inlined_call_operand.hbm [shape: f32[128,128], index: 6, kind: input, shape index: {}]
  %s7 = inlined_call_operand.hbm [shape: f32[16,128], index: 7, kind: output, shape index: {0}]
  %s8 = inlined_call_operand.hbm [shape: f32[16,128], index: 8, kind: output, shape index: {1}]
  %9 = xla_tuple %s7, %s8
  %s10 = sld [smem:[#allocation0]]
  $region58: #{tpu_custom_call.1} parent=0
    _
  %s12 = ssub.s32 1, %s10
  %s13 = scalar_select 0, %s12, %s10
  $region1: #{tpu_custom_call.1} parent=0
    #allocation2 [shape = 'u8[65536]{0}', space=vmem, size = 0x10000, scoped, tag = 'input window, operand 3, single buffered']
    #allocation3 [shape = 's32[1]{0}', space=sflag, size = 0x4, scoped, tag = 'scoped memory for tpu_custom_call.1']
    #allocation4 [shape = 's32[1]{0}', space=sflag, size = 0x4, scoped, tag = 'scoped memory for tpu_custom_call.1']
    #allocation5 [shape = 'u8[196608]{0}', space=vmem, size = 0x30000, scoped, tag = 'input window, operand 5, single buffered']
    #allocation6 [shape = 's32[1]{0}', space=sflag, size = 0x4, scoped, tag = 'scoped memory for tpu_custom_call.1']
    #allocation7 [shape = 'u8[65536]{0}', space=vmem, size = 0x10000, scoped, tag = 'input window, operand 6, single buffered']
    #allocation8 [shape = 'u8[8192]{0}', space=vmem, size = 0x2000, scoped, tag = 'output window, operand 0, single buffered']
    #allocation9 [shape = 'u8[8192]{0}', space=vmem, size = 0x2000, scoped, tag = 'output window, operand 1, single buffered']
    #allocation10 [shape = 's32[1]{0}', space=sflag, size = 0x4, scoped, tag = 'scoped memory for tpu_custom_call.1']
    %14 = vsyncpa [#allocation3], 0
    %15 = vsyncpa [#allocation6], 0
    %16 = vsyncpa [#allocation4], 0
    %17 = vsyncpa [#allocation10], 0
    // Predicated region
    $region2: #{tpu_custom_call.1} parent=1 // pred_check
      _
    $region3: #{tpu_custom_call.1} parent=1 // pred_check_branch
      %19 = sbr.rel (0) target = $region5
    $region4: #{tpu_custom_call.1} parent=1 // pred_region
      _
    $region5: #{tpu_custom_call.1} parent=1 // pred_fallthru
      _
    // Predicated region
    $region6: #{tpu_custom_call.1} parent=1 // pred_check
      _
    $region7: #{tpu_custom_call.1} parent=1 // pred_check_branch
      %21 = sbr.rel (0) target = $region9
    $region8: #{tpu_custom_call.1} parent=1 // pred_region
      _
    $region9: #{tpu_custom_call.1} parent=1 // pred_fallthru
      _
    // Predicated region
    $region10: #{tpu_custom_call.1} parent=1 // pred_check
      _
    $region11: #{tpu_custom_call.1} parent=1 // pred_check_branch
      %23 = sbr.rel (0) target = $region13
    $region12: #{tpu_custom_call.1} parent=1 // pred_region
      _
    $region13: #{tpu_custom_call.1} parent=1 // pred_fallthru
      _
    // Predicated region
    $region14: #{tpu_custom_call.1} parent=1 // pred_check
      _
    $region15: #{tpu_custom_call.1} parent=1 // pred_check_branch
      %25 = sbr.rel (0) target = $region17
    $region16: #{tpu_custom_call.1} parent=1 // pred_region
      %s27 = ssub.s32 2048, 2048
      %28 = vsyncadd [#allocation3], %s27
      %s29 = sshll.u32 [#allocation2], 4
      %s30 = int_to_ptr.vmem [resolvable:$true] %s29
      %35 = dma.hbm_to_vmem [thread:$0]  %s3, 2048, %s30, [#allocation3], 512, 512, 32
    $region17: #{tpu_custom_call.1} parent=1 // pred_fallthru
      _
    // Predicated region
    $region18: #{tpu_custom_call.1} parent=1 // pred_check
      _
    $region19: #{tpu_custom_call.1} parent=1 // pred_check_branch
      %37 = sbr.rel (0) target = $region21
    $region20: #{tpu_custom_call.1} parent=1 // pred_region
      _
    $region21: #{tpu_custom_call.1} parent=1 // pred_fallthru
      _
    // Predicated region
    $region22: #{tpu_custom_call.1} parent=1 // pred_check
      _
    $region23: #{tpu_custom_call.1} parent=1 // pred_check_branch
      %39 = sbr.rel (0) target = $region25
    $region24: #{tpu_custom_call.1} parent=1 // pred_region
      %s41 = ssub.s32 6144, 6144
      %42 = vsyncadd [#allocation6], %s41
      %s43 = sshll.u32 [#allocation5], 4
      %s44 = int_to_ptr.vmem [resolvable:$true] %s43
      %49 = dma.hbm_to_vmem [thread:$0]  %s5, 6144, %s44, [#allocation6], 384, 384, 24
    $region25: #{tpu_custom_call.1} parent=1 // pred_fallthru
      _
    // Predicated region
    $region26: #{tpu_custom_call.1} parent=1 // pred_check
      _
    $region27: #{tpu_custom_call.1} parent=1 // pred_check_branch
      %51 = sbr.rel (0) target = $region29
    $region28: #{tpu_custom_call.1} parent=1 // pred_region
      %s53 = ssub.s32 2048, 2048
      %54 = vsyncadd [#allocation6], %s53
      %s55 = sshll.u32 [#allocation7], 4
      %s56 = int_to_ptr.vmem [resolvable:$true] %s55
      %61 = dma.hbm_to_vmem [thread:$0]  %s6, 2048, %s56, [#allocation6], 128, 128, 8
    $region29: #{tpu_custom_call.1} parent=1 // pred_fallthru
      _
    // Predicated region
    $region30: #{tpu_custom_call.1} parent=1 // pred_check
      _
    $region31: #{tpu_custom_call.1} parent=1 // pred_check_branch
      %63 = sbr.rel (0) target = $region33
    $region32: #{tpu_custom_call.1} parent=1 // pred_region
      %64 = dma.done [#allocation3], 2048
    $region33: #{tpu_custom_call.1} parent=1 // pred_fallthru
      _
    // Predicated region
    $region34: #{tpu_custom_call.1} parent=1 // pred_check
      _
    $region35: #{tpu_custom_call.1} parent=1 // pred_check_branch
      %66 = sbr.rel (0) target = $region37
    $region36: #{tpu_custom_call.1} parent=1 // pred_region
      %67 = dma.done [#allocation6], 6144
    $region37: #{tpu_custom_call.1} parent=1 // pred_fallthru
      _
    // Predicated region
    $region38: #{tpu_custom_call.1} parent=1 // pred_check
      _
    $region39: #{tpu_custom_call.1} parent=1 // pred_check_branch
      %69 = sbr.rel (0) target = $region41
    $region40: #{tpu_custom_call.1} parent=1 // pred_region
      %70 = dma.done [#allocation6], 2048
    $region41: #{tpu_custom_call.1} parent=1 // pred_fallthru
      _
    %v71 = vld [vmem:[%s0] sm:$0xff]
    %v72 = vld [vmem:[%s0 + $0x8] sm:$0xff]
    %v73 = vld [vmem:[%s2] sm:$0xff]
    %v74 = vld [vmem:[%s2 + $0x8] sm:$0xff]
    %v75 = vld [vmem:[%s1] sm:$0xff]
    %v76 = vld [vmem:[%s1 + $0x8] sm:$0xff]
    %v77 = vld [vmem:[%s1 + $0x10] sm:$0xff]
    %v78 = vld [vmem:[%s1 + $0x18] sm:$0xff]
    %v79 = vld [vmem:[%s1 + $0x20] sm:$0xff]
    %v80 = vld [vmem:[%s1 + $0x28] sm:$0xff]
    %v81 = vld [vmem:[%s1 + $0x30] sm:$0xff]
    %v82 = vld [vmem:[%s1 + $0x38] sm:$0xff]
    %v83 = vld [vmem:[#allocation5] sm:$0xff]
    %v84 = vld [vmem:[#allocation5 + $0x8] sm:$0xff]
    %v85 = vld [vmem:[#allocation5 + $0x10] sm:$0xff]
    %v86 = vld [vmem:[#allocation5 + $0x18] sm:$0xff]
    %v87 = vld [vmem:[#allocation5 + $0x20] sm:$0xff]
    %v88 = vld [vmem:[#allocation5 + $0x28] sm:$0xff]
    %v89 = vld [vmem:[#allocation5 + $0x30] sm:$0xff]
    %v90 = vld [vmem:[#allocation5 + $0x38] sm:$0xff]
    %v91 = vld [vmem:[#allocation5 + $0x40] sm:$0xff]
    %v92 = vld [vmem:[#allocation5 + $0x48] sm:$0xff]
    %v93 = vld [vmem:[#allocation5 + $0x50] sm:$0xff]
    %v94 = vld [vmem:[#allocation5 + $0x58] sm:$0xff]
    %v95 = vld [vmem:[#allocation5 + $0x60] sm:$0xff]
    %v96 = vld [vmem:[#allocation5 + $0x68] sm:$0xff]
    %v97 = vld [vmem:[#allocation5 + $0x70] sm:$0xff]
    %v98 = vld [vmem:[#allocation5 + $0x78] sm:$0xff]
    %v99 = vld [vmem:[#allocation5 + $0x80] sm:$0xff]
    %v100 = vld [vmem:[#allocation5 + $0x88] sm:$0xff]
    %v101 = vld [vmem:[#allocation5 + $0x90] sm:$0xff]
    %v102 = vld [vmem:[#allocation5 + $0x98] sm:$0xff]
    %v103 = vld [vmem:[#allocation5 + $0xa0] sm:$0xff]
    %v104 = vld [vmem:[#allocation5 + $0xa8] sm:$0xff]
    %v105 = vld [vmem:[#allocation5 + $0xb0] sm:$0xff]
    %v106 = vld [vmem:[#allocation5 + $0xb8] sm:$0xff]
    %v107 = vld [vmem:[#allocation5 + $0xc0] sm:$0xff]
    %v108 = vld [vmem:[#allocation5 + $0xc8] sm:$0xff]
    %v109 = vld [vmem:[#allocation5 + $0xd0] sm:$0xff]
    %v110 = vld [vmem:[#allocation5 + $0xd8] sm:$0xff]
    %v111 = vld [vmem:[#allocation5 + $0xe0] sm:$0xff]
    %v112 = vld [vmem:[#allocation5 + $0xe8] sm:$0xff]
    %v113 = vld [vmem:[#allocation5 + $0xf0] sm:$0xff]
    %v114 = vld [vmem:[#allocation5 + $0xf8] sm:$0xff]
    %v115 = vld [vmem:[#allocation5 + $0x100] sm:$0xff]
    %v116 = vld [vmem:[#allocation5 + $0x108] sm:$0xff]
    %v117 = vld [vmem:[#allocation5 + $0x110] sm:$0xff]
    %v118 = vld [vmem:[#allocation5 + $0x118] sm:$0xff]
    %v119 = vld [vmem:[#allocation5 + $0x120] sm:$0xff]
    %v120 = vld [vmem:[#allocation5 + $0x128] sm:$0xff]
    %v121 = vld [vmem:[#allocation5 + $0x130] sm:$0xff]
    %v122 = vld [vmem:[#allocation5 + $0x138] sm:$0xff]
    %v123 = vld [vmem:[#allocation5 + $0x140] sm:$0xff]
    %v124 = vld [vmem:[#allocation5 + $0x148] sm:$0xff]
    %v125 = vld [vmem:[#allocation5 + $0x150] sm:$0xff]
    %v126 = vld [vmem:[#allocation5 + $0x158] sm:$0xff]
    %v127 = vld [vmem:[#allocation5 + $0x160] sm:$0xff]
    %v128 = vld [vmem:[#allocation5 + $0x168] sm:$0xff]
    %v129 = vld [vmem:[#allocation5 + $0x170] sm:$0xff]
    %v130 = vld [vmem:[#allocation5 + $0x178] sm:$0xff]
    %v131 = vld [vmem:[#allocation7] sm:$0xff]
    %v132 = vld [vmem:[#allocation7 + $0x8] sm:$0xff]
    %v133 = vld [vmem:[#allocation7 + $0x10] sm:$0xff]
    %v134 = vld [vmem:[#allocation7 + $0x18] sm:$0xff]
    %v135 = vld [vmem:[#allocation7 + $0x20] sm:$0xff]
    %v136 = vld [vmem:[#allocation7 + $0x28] sm:$0xff]
    %v137 = vld [vmem:[#allocation7 + $0x30] sm:$0xff]
    %v138 = vld [vmem:[#allocation7 + $0x38] sm:$0xff]
    %v139 = vld [vmem:[#allocation7 + $0x40] sm:$0xff]
    %v140 = vld [vmem:[#allocation7 + $0x48] sm:$0xff]
    %v141 = vld [vmem:[#allocation7 + $0x50] sm:$0xff]
    %v142 = vld [vmem:[#allocation7 + $0x58] sm:$0xff]
    %v143 = vld [vmem:[#allocation7 + $0x60] sm:$0xff]
    %v144 = vld [vmem:[#allocation7 + $0x68] sm:$0xff]
    %v145 = vld [vmem:[#allocation7 + $0x70] sm:$0xff]
    %v146 = vld [vmem:[#allocation7 + $0x78] sm:$0xff]
    %v147 = vld [vmem:[#allocation2] sm:$0xff]
    %v148 = vld [vmem:[#allocation2 + $0x8] sm:$0xff]
    %v149 = vld [vmem:[#allocation2 + $0x10] sm:$0xff]
    %v150 = vld [vmem:[#allocation2 + $0x18] sm:$0xff]
    %v151 = vld [vmem:[#allocation2 + $0x20] sm:$0xff]
    %v152 = vld [vmem:[#allocation2 + $0x28] sm:$0xff]
    %v153 = vld [vmem:[#allocation2 + $0x30] sm:$0xff]
    %v154 = vld [vmem:[#allocation2 + $0x38] sm:$0xff]
    %v155 = vld [vmem:[#allocation2 + $0x40] sm:$0xff]
    %v156 = vld [vmem:[#allocation2 + $0x48] sm:$0xff]
    %v157 = vld [vmem:[#allocation2 + $0x50] sm:$0xff]
    %v158 = vld [vmem:[#allocation2 + $0x58] sm:$0xff]
    %v159 = vld [vmem:[#allocation2 + $0x60] sm:$0xff]
    %v160 = vld [vmem:[#allocation2 + $0x68] sm:$0xff]
    %v161 = vld [vmem:[#allocation2 + $0x70] sm:$0xff]
    %v162 = vld [vmem:[#allocation2 + $0x78] sm:$0xff]
    %v163 = vld [vmem:[%s4] sm:$0xf]
    %v165 = vlaneseq
    %v166 = vshrl.u32 %v165, 7
    %v167 = vsub.s32 0, %v166
    %v168 = vrot.slane %v163, %v167
    %v169 = vlaneseq
    %v170 = vshrl.u32 %v169, 7
    %v171 = vsub.s32 1, %v170
    %v172 = vrot.slane %v163, %v171
    %v173 = vlaneseq
    %v174 = vshrl.u32 %v173, 7
    %v175 = vsub.s32 2, %v174
    %v176 = vrot.slane %v163, %v175
    %v177 = vlaneseq
    %v178 = vshrl.u32 %v177, 7
    %v179 = vsub.s32 3, %v178
    %v180 = vrot.slane %v163, %v179
    %vm185 = vcmask 261120
    %v187 = vsel %vm185, %v71, 0
    %v190 = vsel %vm185, %v72, 0
    %192 = vmatprep.subr.mxu0 %v148
    %193 = vmatpush1.msra.mxu0 %v147
    %194 = vmatprep.subr.mxu0 %v152
    %195 = vmatpush1.msra.mxu0 %v151
    %196 = vmatprep.subr.mxu0 %v156
    %197 = vmatpush1.msra.mxu0 %v155
    %198 = vmatprep.subr.mxu0 %v160
    %199 = vmatpush1.msra.mxu0 %v159
    %200 = vmatprep.subr.mxu0 0.0
    %201 = vmatpush1.msra.mxu0 0.0
    %202 = vmatprep.subr.mxu0 0.0
    %203 = vmatpush1.msra.mxu0 0.0
    %204 = vmatprep.subr.mxu0 0.0
    %205 = vmatpush1.msra.mxu0 0.0
    %206 = vmatprep.subr.mxu0 0.0
    %207 = vmatpush1.msra.mxu0 0.0
    %208 = vmatprep.subr.mxu0 0.0
    %209 = vmatpush1.msra.mxu0 0.0
    %210 = vmatprep.subr.mxu0 0.0
    %211 = vmatpush1.msra.mxu0 0.0
    %212 = vmatprep.subr.mxu0 0.0
    %213 = vmatpush1.msra.mxu0 0.0
    %214 = vmatprep.subr.mxu0 0.0
    %215 = vmatpush1.msra.mxu0 0.0
    %216 = vmatprep.subr.mxu0 0.0
    %217 = vmatpush1.msra.mxu0 0.0
    %218 = vmatprep.subr.mxu0 0.0
    %219 = vmatpush1.msra.mxu0 0.0
    %220 = vmatprep.subr.mxu0 0.0
    %221 = vmatpush1.msra.mxu0 0.0
    %222 = vmatprep.subr.mxu0 0.0
    %223 = vmatpush1.msra.mxu0 0.0
    %224 = vmatprep.subr.mxu0 0.0
    %225 = vmatpush1.msra.mxu0 0.0
    %226 = vmatprep.subr.mxu0 0.0
    %227 = vmatpush1.msra.mxu0 0.0
    %228 = vmatprep.subr.mxu0 0.0
    %229 = vmatpush1.msra.mxu0 0.0
    %230 = vmatprep.subr.mxu0 0.0
    %231 = vmatpush1.msra.mxu0 0.0
    %232 = vmatprep.subr.mxu0 0.0
    %233 = vmatpush1.msra.mxu0 0.0
    %234 = vmatprep.subr.mxu0 0.0
    %235 = vmatpush1.msra.mxu0 0.0
    %236 = vmatprep.subr.mxu0 0.0
    %237 = vmatpush1.msra.mxu0 0.0
    %238 = vmatprep.subr.mxu0 0.0
    %239 = vmatpush1.msra.mxu0 0.0
    %240 = vmatprep.subr.mxu0 0.0
    %241 = vmatpush1.msra.mxu0 0.0
    %242 = vmatprep.subr.mxu0 0.0
    %243 = vmatpush1.msra.mxu0 0.0
    %244 = vmatprep.subr.mxu0 0.0
    %245 = vmatpush1.msra.mxu0 0.0
    %246 = vmatprep.subr.mxu0 0.0
    %247 = vmatpush1.msra.mxu0 0.0
    %248 = vmatprep.subr.mxu0 0.0
    %249 = vmatpush1.msra.mxu0 0.0
    %250 = vmatprep.subr.mxu0 0.0
    %251 = vmatpush1.msra.mxu0 0.0
    %252 = vmatprep.subr.mxu0 0.0
    %253 = vmatpush1.msra.mxu0 0.0
    %254 = vmatprep.subr.mxu0 0.0
    %255 = vmatpush1.msra.mxu0 0.0
    %256 = vmatprep.mubr.f32.mxu0 0.0
    %257 = vmatmul.mubr.f32.gmra.mrb[0].mxu0 %v187
    %v258 = vpop.f32.mrb[0].mxu0
    %v259 = vadd.f32 %v168, %v258
    %v260 = vpop.f32.mrb[0].mxu0
    %v261 = vadd.f32 %v172, %v260
    %262 = vmatprep.mubr.f32.mxu0 0.0
    %263 = vmatmul.mubr.f32.gmra.mrb[0].mxu0 %v190
    %v264 = vpop.f32.mrb[0].mxu0
    %v265 = vadd.f32 %v168, %v264
    %v266 = vpop.f32.mrb[0].mxu0
    %v267 = vadd.f32 %v172, %v266
    %268 = vdwg.mxu0
    %269 = vmatprep.subr.mxu0 %v150
    %270 = vmatpush1.msra.mxu0 %v149
    %271 = vmatprep.subr.mxu0 %v154
    %272 = vmatpush1.msra.mxu0 %v153
    %273 = vmatprep.subr.mxu0 %v158
    %274 = vmatpush1.msra.mxu0 %v157
    %275 = vmatprep.subr.mxu0 %v162
    %276 = vmatpush1.msra.mxu0 %v161
    %277 = vmatprep.subr.mxu0 0.0
    %278 = vmatpush1.msra.mxu0 0.0
    %279 = vmatprep.subr.mxu0 0.0
    %280 = vmatpush1.msra.mxu0 0.0
    %281 = vmatprep.subr.mxu0 0.0
    %282 = vmatpush1.msra.mxu0 0.0
    %283 = vmatprep.subr.mxu0 0.0
    %284 = vmatpush1.msra.mxu0 0.0
    %285 = vmatprep.subr.mxu0 0.0
    %286 = vmatpush1.msra.mxu0 0.0
    %287 = vmatprep.subr.mxu0 0.0
    %288 = vmatpush1.msra.mxu0 0.0
    %289 = vmatprep.subr.mxu0 0.0
    %290 = vmatpush1.msra.mxu0 0.0
    %291 = vmatprep.subr.mxu0 0.0
    %292 = vmatpush1.msra.mxu0 0.0
    %293 = vmatprep.subr.mxu0 0.0
    %294 = vmatpush1.msra.mxu0 0.0
    %295 = vmatprep.subr.mxu0 0.0
    %296 = vmatpush1.msra.mxu0 0.0
    %297 = vmatprep.subr.mxu0 0.0
    %298 = vmatpush1.msra.mxu0 0.0
    %299 = vmatprep.subr.mxu0 0.0
    %300 = vmatpush1.msra.mxu0 0.0
    %301 = vmatprep.subr.mxu0 0.0
    %302 = vmatpush1.msra.mxu0 0.0
    %303 = vmatprep.subr.mxu0 0.0
    %304 = vmatpush1.msra.mxu0 0.0
    %305 = vmatprep.subr.mxu0 0.0
    %306 = vmatpush1.msra.mxu0 0.0
    %307 = vmatprep.subr.mxu0 0.0
    %308 = vmatpush1.msra.mxu0 0.0
    %309 = vmatprep.subr.mxu0 0.0
    %310 = vmatpush1.msra.mxu0 0.0
    %311 = vmatprep.subr.mxu0 0.0
    %312 = vmatpush1.msra.mxu0 0.0
    %313 = vmatprep.subr.mxu0 0.0
    %314 = vmatpush1.msra.mxu0 0.0
    %315 = vmatprep.subr.mxu0 0.0
    %316 = vmatpush1.msra.mxu0 0.0
    %317 = vmatprep.subr.mxu0 0.0
    %318 = vmatpush1.msra.mxu0 0.0
    %319 = vmatprep.subr.mxu0 0.0
    %320 = vmatpush1.msra.mxu0 0.0
    %321 = vmatprep.subr.mxu0 0.0
    %322 = vmatpush1.msra.mxu0 0.0
    %323 = vmatprep.subr.mxu0 0.0
    %324 = vmatpush1.msra.mxu0 0.0
    %325 = vmatprep.subr.mxu0 0.0
    %326 = vmatpush1.msra.mxu0 0.0
    %327 = vmatprep.subr.mxu0 0.0
    %328 = vmatpush1.msra.mxu0 0.0
    %329 = vmatprep.subr.mxu0 0.0
    %330 = vmatpush1.msra.mxu0 0.0
    %331 = vmatprep.subr.mxu0 0.0
    %332 = vmatpush1.msra.mxu0 0.0
    %333 = vmatprep.mubr.f32.mxu0 0.0
    %334 = vmatmul.mubr.f32.gmra.mrb[0].mxu0 %v187
    %v335 = vpop.f32.mrb[0].mxu0
    %v336 = vadd.f32 %v176, %v335
    %v337 = vpop.f32.mrb[0].mxu0
    %v338 = vadd.f32 %v180, %v337
    %339 = vmatprep.mubr.f32.mxu0 0.0
    %340 = vmatmul.mubr.f32.gmra.mrb[0].mxu0 %v190
    %v341 = vpop.f32.mrb[0].mxu0
    %v342 = vadd.f32 %v176, %v341
    %v343 = vpop.f32.mrb[0].mxu0
    %v344 = vadd.f32 %v180, %v343
    %345 = vdwg.mxu0
    %v346 = vxor.u32 %v259, 2147483648
    %v347 = vxor.u32 %v265, 2147483648
    %v348 = vmul.f32 %v346, 1.442695
    %v349 = vpow.pop %v348
    %v350 = vmul.f32 %v347, 1.442695
    %v351 = vpow.pop %v350
    %v352 = vadd.f32 %v349, 1.0
    %v353 = vadd.f32 %v351, 1.0
    %v354 = vrcp.pop %v352
    %v355 = vmul.f32 1.0, %v354
    %v356 = vrcp.pop %v353
    %v357 = vmul.f32 1.0, %v356
    %v358 = vxor.u32 %v261, 2147483648
    %v359 = vxor.u32 %v267, 2147483648
    %v360 = vmul.f32 %v358, 1.442695
    %v361 = vpow.pop %v360
    %v362 = vmul.f32 %v359, 1.442695
    %v363 = vpow.pop %v362
    %v364 = vadd.f32 %v361, 1.0
    %v365 = vadd.f32 %v363, 1.0
    %v366 = vrcp.pop %v364
    %v367 = vmul.f32 1.0, %v366
    %v368 = vrcp.pop %v365
    %v369 = vmul.f32 1.0, %v368
    %v370 = vtanh.pop %v336
    %v371 = vtanh.pop %v342
    %v372 = vmul.f32 %v355, %v370
    %v373 = vmul.f32 %v357, %v371
    %v374 = vtanh.pop %v372
    %v375 = vtanh.pop %v373
    %v376 = vmul.f32 %v367, %v374
    %v377 = vmul.f32 %v369, %v375
    %378 = vmatprep.subr.mxu0 0.0
    %379 = vmatpush1.msra.mxu0 %v131
    %380 = vmatprep.subr.mxu0 0.0
    %381 = vmatpush1.msra.mxu0 %v132
    %382 = vmatprep.subr.mxu0 0.0
    %383 = vmatpush1.msra.mxu0 %v133
    %384 = vmatprep.subr.mxu0 0.0
    %385 = vmatpush1.msra.mxu0 %v134
    %386 = vmatprep.subr.mxu0 0.0
    %387 = vmatpush1.msra.mxu0 %v135
    %388 = vmatprep.subr.mxu0 0.0
    %389 = vmatpush1.msra.mxu0 %v136
    %390 = vmatprep.subr.mxu0 0.0
    %391 = vmatpush1.msra.mxu0 %v137
    %392 = vmatprep.subr.mxu0 0.0
    %393 = vmatpush1.msra.mxu0 %v138
    %394 = vmatprep.subr.mxu0 0.0
    %395 = vmatpush1.msra.mxu0 %v139
    %396 = vmatprep.subr.mxu0 0.0
    %397 = vmatpush1.msra.mxu0 %v140
    %398 = vmatprep.subr.mxu0 0.0
    %399 = vmatpush1.msra.mxu0 %v141
    %400 = vmatprep.subr.mxu0 0.0
    %401 = vmatpush1.msra.mxu0 %v142
    %402 = vmatprep.subr.mxu0 0.0
    %403 = vmatpush1.msra.mxu0 %v143
    %404 = vmatprep.subr.mxu0 0.0
    %405 = vmatpush1.msra.mxu0 %v144
    %406 = vmatprep.subr.mxu0 0.0
    %407 = vmatpush1.msra.mxu0 %v145
    %408 = vmatprep.subr.mxu0 0.0
    %409 = vmatpush1.msra.mxu0 %v146
    %410 = vmatprep.subr.mxu0 0.0
    %411 = vmatpush1.msra.mxu0 0.0
    %412 = vmatprep.subr.mxu0 0.0
    %413 = vmatpush1.msra.mxu0 0.0
    %414 = vmatprep.subr.mxu0 0.0
    %415 = vmatpush1.msra.mxu0 0.0
    %416 = vmatprep.subr.mxu0 0.0
    %417 = vmatpush1.msra.mxu0 0.0
    %418 = vmatprep.subr.mxu0 0.0
    %419 = vmatpush1.msra.mxu0 0.0
    %420 = vmatprep.subr.mxu0 0.0
    %421 = vmatpush1.msra.mxu0 0.0
    %422 = vmatprep.subr.mxu0 0.0
    %423 = vmatpush1.msra.mxu0 0.0
    %424 = vmatprep.subr.mxu0 0.0
    %425 = vmatpush1.msra.mxu0 0.0
    %426 = vmatprep.subr.mxu0 0.0
    %427 = vmatpush1.msra.mxu0 0.0
    %428 = vmatprep.subr.mxu0 0.0
    %429 = vmatpush1.msra.mxu0 0.0
    %430 = vmatprep.subr.mxu0 0.0
    %431 = vmatpush1.msra.mxu0 0.0
    %432 = vmatprep.subr.mxu0 0.0
    %433 = vmatpush1.msra.mxu0 0.0
    %434 = vmatprep.subr.mxu0 0.0
    %435 = vmatpush1.msra.mxu0 0.0
    %436 = vmatprep.subr.mxu0 0.0
    %437 = vmatpush1.msra.mxu0 0.0
    %438 = vmatprep.subr.mxu0 0.0
    %439 = vmatpush1.msra.mxu0 0.0
    %440 = vmatprep.subr.mxu0 0.0
    %441 = vmatpush1.msra.mxu0 0.0
    %442 = vmatprep.mubr.f32.mxu0 0.0
    %443 = vmatmul.mubr.f32.gmra.mrb[0].mxu0 %v376
    %v444 = vpop.f32.mrb[0].mxu0
    %v445 = vadd.f32 0.0, %v444
    %v446 = vpop.f32.mrb[0].mxu0
    %447 = vmatprep.mubr.f32.mxu0 0.0
    %448 = vmatmul.mubr.f32.gmra.mrb[0].mxu0 %v377
    %v449 = vpop.f32.mrb[0].mxu0
    %v450 = vadd.f32 0.0, %v449
    %v451 = vpop.f32.mrb[0].mxu0
    %452 = vdwg.mxu0
    %vm453 = vcmask 130048
    %v455 = vsel %vm453, %v73, 0
    %v458 = vsel %vm453, %v74, 0
    %460 = vmatprep.subr.mxu0 0.0
    %461 = vmatpush1.msra.mxu0 %v376
    %462 = vmatprep.subr.mxu0 0.0
    %463 = vmatpush1.msra.mxu0 %v377
    %464 = vmatprep.subr.mxu0 0.0
    %465 = vmatpush1.msra.mxu0 0.0
    %466 = vmatprep.subr.mxu0 0.0
    %467 = vmatpush1.msra.mxu0 0.0
    %468 = vmatprep.subr.mxu0 0.0
    %469 = vmatpush1.msra.mxu0 0.0
    %470 = vmatprep.subr.mxu0 0.0
    %471 = vmatpush1.msra.mxu0 0.0
    %472 = vmatprep.subr.mxu0 0.0
    %473 = vmatpush1.msra.mxu0 0.0
    %474 = vmatprep.subr.mxu0 0.0
    %475 = vmatpush1.msra.mxu0 0.0
    %476 = vmatprep.subr.mxu0 0.0
    %477 = vmatpush1.msra.mxu0 0.0
    %478 = vmatprep.subr.mxu0 0.0
    %479 = vmatpush1.msra.mxu0 0.0
    %480 = vmatprep.subr.mxu0 0.0
    %481 = vmatpush1.msra.mxu0 0.0
    %482 = vmatprep.subr.mxu0 0.0
    %483 = vmatpush1.msra.mxu0 0.0
    %484 = vmatprep.subr.mxu0 0.0
    %485 = vmatpush1.msra.mxu0 0.0
    %486 = vmatprep.subr.mxu0 0.0
    %487 = vmatpush1.msra.mxu0 0.0
    %488 = vmatprep.subr.mxu0 0.0
    %489 = vmatpush1.msra.mxu0 0.0
    %490 = vmatprep.subr.mxu0 0.0
    %491 = vmatpush1.msra.mxu0 0.0
    %492 = vmatprep.subr.mxu0 0.0
    %493 = vmatpush1.msra.mxu0 0.0
    %494 = vmatprep.subr.mxu0 0.0
    %495 = vmatpush1.msra.mxu0 0.0
    %496 = vmatprep.subr.mxu0 0.0
    %497 = vmatpush1.msra.mxu0 0.0
    %498 = vmatprep.subr.mxu0 0.0
    %499 = vmatpush1.msra.mxu0 0.0
    %500 = vmatprep.subr.mxu0 0.0
    %501 = vmatpush1.msra.mxu0 0.0
    %502 = vmatprep.subr.mxu0 0.0
    %503 = vmatpush1.msra.mxu0 0.0
    %504 = vmatprep.subr.mxu0 0.0
    %505 = vmatpush1.msra.mxu0 0.0
    %506 = vmatprep.subr.mxu0 0.0
    %507 = vmatpush1.msra.mxu0 0.0
    %508 = vmatprep.subr.mxu0 0.0
    %509 = vmatpush1.msra.mxu0 0.0
    %510 = vmatprep.subr.mxu0 0.0
    %511 = vmatpush1.msra.mxu0 0.0
    %512 = vmatprep.subr.mxu0 0.0
    %513 = vmatpush1.msra.mxu0 0.0
    %514 = vmatprep.subr.mxu0 0.0
    %515 = vmatpush1.msra.mxu0 0.0
    %516 = vmatprep.subr.mxu0 0.0
    %517 = vmatpush1.msra.mxu0 0.0
    %518 = vmatprep.subr.mxu0 0.0
    %519 = vmatpush1.msra.mxu0 0.0
    %520 = vmatprep.subr.mxu0 0.0
    %521 = vmatpush1.msra.mxu0 0.0
    %522 = vmatprep.subr.mxu0 0.0
    %523 = vmatpush1.msra.mxu0 0.0
    %524 = vmatprep.mubr.f32.mxu0 0.0
    %525 = vmatmul.mubr.f32.gmra.mrb[0].mxu0 %v455
    %v526 = vpop.f32.mrb[0].mxu0
    %v527 = vadd.f32 0.0, %v526
    %v528 = vpop.f32.mrb[0].mxu0
    %529 = vmatprep.mubr.f32.mxu0 0.0
    %530 = vmatmul.mubr.f32.gmra.mrb[0].mxu0 %v458
    %v531 = vpop.f32.mrb[0].mxu0
    %v532 = vadd.f32 0.0, %v531
    %v533 = vpop.f32.mrb[0].mxu0
    %534 = vdwg.mxu0
    %v536 = vsel %vm453, %v75, 0
    %v539 = vsel %vm453, %v76, 0
    %v542 = vsel %vm453, %v77, 0
    %v545 = vsel %vm453, %v78, 0
    %v548 = vsel %vm453, %v79, 0
    %v551 = vsel %vm453, %v80, 0
    %v554 = vsel %vm453, %v81, 0
    %v557 = vsel %vm453, %v82, 0
    %559 = vmatprep.subr.mxu0 0.0
    %560 = vmatpush1.msra.mxu0 %v445
    %561 = vmatprep.subr.mxu0 0.0
    %562 = vmatpush1.msra.mxu0 %v450
    %563 = vmatprep.subr.mxu0 0.0
    %564 = vmatpush1.msra.mxu0 0.0
    %565 = vmatprep.subr.mxu0 0.0
    %566 = vmatpush1.msra.mxu0 0.0
    %567 = vmatprep.subr.mxu0 0.0
    %568 = vmatpush1.msra.mxu0 0.0
    %569 = vmatprep.subr.mxu0 0.0
    %570 = vmatpush1.msra.mxu0 0.0
    %571 = vmatprep.subr.mxu0 0.0
    %572 = vmatpush1.msra.mxu0 0.0
    %573 = vmatprep.subr.mxu0 0.0
    %574 = vmatpush1.msra.mxu0 0.0
    %575 = vmatprep.subr.mxu0 0.0
    %576 = vmatpush1.msra.mxu0 0.0
    %577 = vmatprep.subr.mxu0 0.0
    %578 = vmatpush1.msra.mxu0 0.0
    %579 = vmatprep.subr.mxu0 0.0
    %580 = vmatpush1.msra.mxu0 0.0
    %581 = vmatprep.subr.mxu0 0.0
    %582 = vmatpush1.msra.mxu0 0.0
    %583 = vmatprep.subr.mxu0 0.0
    %584 = vmatpush1.msra.mxu0 0.0
    %585 = vmatprep.subr.mxu0 0.0
    %586 = vmatpush1.msra.mxu0 0.0
    %587 = vmatprep.subr.mxu0 0.0
    %588 = vmatpush1.msra.mxu0 0.0
    %589 = vmatprep.subr.mxu0 0.0
    %590 = vmatpush1.msra.mxu0 0.0
    %591 = vmatprep.subr.mxu0 0.0
    %592 = vmatpush1.msra.mxu0 0.0
    %593 = vmatprep.subr.mxu0 0.0
    %594 = vmatpush1.msra.mxu0 0.0
    %595 = vmatprep.subr.mxu0 0.0
    %596 = vmatpush1.msra.mxu0 0.0
    %597 = vmatprep.subr.mxu0 0.0
    %598 = vmatpush1.msra.mxu0 0.0
    %599 = vmatprep.subr.mxu0 0.0
    %600 = vmatpush1.msra.mxu0 0.0
    %601 = vmatprep.subr.mxu0 0.0
    %602 = vmatpush1.msra.mxu0 0.0
    %603 = vmatprep.subr.mxu0 0.0
    %604 = vmatpush1.msra.mxu0 0.0
    %605 = vmatprep.subr.mxu0 0.0
    %606 = vmatpush1.msra.mxu0 0.0
    %607 = vmatprep.subr.mxu0 0.0
    %608 = vmatpush1.msra.mxu0 0.0
    %609 = vmatprep.subr.mxu0 0.0
    %610 = vmatpush1.msra.mxu0 0.0
    %611 = vmatprep.subr.mxu0 0.0
    %612 = vmatpush1.msra.mxu0 0.0
    %613 = vmatprep.subr.mxu0 0.0
    %614 = vmatpush1.msra.mxu0 0.0
    %615 = vmatprep.subr.mxu0 0.0
    %616 = vmatpush1.msra.mxu0 0.0
    %617 = vmatprep.subr.mxu0 0.0
    %618 = vmatpush1.msra.mxu0 0.0
    %619 = vmatprep.subr.mxu0 0.0
    %620 = vmatpush1.msra.mxu0 0.0
    %621 = vmatprep.subr.mxu0 0.0
    %622 = vmatpush1.msra.mxu0 0.0
    %623 = vmatprep.mubr.f32.mxu0 0.0
    %624 = vmatmul.mubr.f32.gmra.mrb[0].mxu0 %v536
    %v625 = vpop.f32.mrb[0].mxu0
    %v626 = vadd.f32 0.0, %v625
    %v627 = vpop.f32.mrb[0].mxu0
    %628 = vmatprep.mubr.f32.mxu0 0.0
    %629 = vmatmul.mubr.f32.gmra.mrb[0].mxu0 %v539
    %v630 = vpop.f32.mrb[0].mxu0
    %v631 = vadd.f32 0.0, %v630
    %v632 = vpop.f32.mrb[0].mxu0
    %633 = vmatprep.mubr.f32.mxu0 0.0
    %634 = vmatmul.mubr.f32.gmra.mrb[0].mxu0 %v542
    %v635 = vpop.f32.mrb[0].mxu0
    %v636 = vadd.f32 0.0, %v635
    %v637 = vpop.f32.mrb[0].mxu0
    %638 = vmatprep.mubr.f32.mxu0 0.0
    %639 = vmatmul.mubr.f32.gmra.mrb[0].mxu0 %v545
    %v640 = vpop.f32.mrb[0].mxu0
    %v641 = vadd.f32 0.0, %v640
    %v642 = vpop.f32.mrb[0].mxu0
    %643 = vmatprep.mubr.f32.mxu0 0.0
    %644 = vmatmul.mubr.f32.gmra.mrb[0].mxu0 %v548
    %v645 = vpop.f32.mrb[0].mxu0
    %v646 = vadd.f32 0.0, %v645
    %v647 = vpop.f32.mrb[0].mxu0
    %648 = vmatprep.mubr.f32.mxu0 0.0
    %649 = vmatmul.mubr.f32.gmra.mrb[0].mxu0 %v551
    %v650 = vpop.f32.mrb[0].mxu0
    %v651 = vadd.f32 0.0, %v650
    %v652 = vpop.f32.mrb[0].mxu0
    %653 = vmatprep.mubr.f32.mxu0 0.0
    %654 = vmatmul.mubr.f32.gmra.mrb[0].mxu0 %v554
    %v655 = vpop.f32.mrb[0].mxu0
    %v656 = vadd.f32 0.0, %v655
    %v657 = vpop.f32.mrb[0].mxu0
    %658 = vmatprep.mubr.f32.mxu0 0.0
    %659 = vmatmul.mubr.f32.gmra.mrb[0].mxu0 %v557
    %v660 = vpop.f32.mrb[0].mxu0
    %v661 = vadd.f32 0.0, %v660
    %v662 = vpop.f32.mrb[0].mxu0
    %663 = vdwg.mxu0
    %664 = vmatprep.subr.mxu0 0.0
    %665 = vmatpush1.msra.mxu0 %v372
    %666 = vmatprep.subr.mxu0 0.0
    %667 = vmatpush1.msra.mxu0 %v373
    %668 = vmatprep.subr.mxu0 0.0
    %669 = vmatpush1.msra.mxu0 0.0
    %670 = vmatprep.subr.mxu0 0.0
    %671 = vmatpush1.msra.mxu0 0.0
    %672 = vmatprep.subr.mxu0 0.0
    %673 = vmatpush1.msra.mxu0 0.0
    %674 = vmatprep.subr.mxu0 0.0
    %675 = vmatpush1.msra.mxu0 0.0
    %676 = vmatprep.subr.mxu0 0.0
    %677 = vmatpush1.msra.mxu0 0.0
    %678 = vmatprep.subr.mxu0 0.0
    %679 = vmatpush1.msra.mxu0 0.0
    %680 = vmatprep.subr.mxu0 0.0
    %681 = vmatpush1.msra.mxu0 0.0
    %682 = vmatprep.subr.mxu0 0.0
    %683 = vmatpush1.msra.mxu0 0.0
    %684 = vmatprep.subr.mxu0 0.0
    %685 = vmatpush1.msra.mxu0 0.0
    %686 = vmatprep.subr.mxu0 0.0
    %687 = vmatpush1.msra.mxu0 0.0
    %688 = vmatprep.subr.mxu0 0.0
    %689 = vmatpush1.msra.mxu0 0.0
    %690 = vmatprep.subr.mxu0 0.0
    %691 = vmatpush1.msra.mxu0 0.0
    %692 = vmatprep.subr.mxu0 0.0
    %693 = vmatpush1.msra.mxu0 0.0
    %694 = vmatprep.subr.mxu0 0.0
    %695 = vmatpush1.msra.mxu0 0.0
    %696 = vmatprep.subr.mxu0 0.0
    %697 = vmatpush1.msra.mxu0 0.0
    %698 = vmatprep.subr.mxu0 0.0
    %699 = vmatpush1.msra.mxu0 0.0
    %700 = vmatprep.subr.mxu0 0.0
    %701 = vmatpush1.msra.mxu0 0.0
    %702 = vmatprep.subr.mxu0 0.0
    %703 = vmatpush1.msra.mxu0 0.0
    %704 = vmatprep.subr.mxu0 0.0
    %705 = vmatpush1.msra.mxu0 0.0
    %706 = vmatprep.subr.mxu0 0.0
    %707 = vmatpush1.msra.mxu0 0.0
    %708 = vmatprep.subr.mxu0 0.0
    %709 = vmatpush1.msra.mxu0 0.0
    %710 = vmatprep.subr.mxu0 0.0
    %711 = vmatpush1.msra.mxu0 0.0
    %712 = vmatprep.subr.mxu0 0.0
    %713 = vmatpush1.msra.mxu0 0.0
    %714 = vmatprep.subr.mxu0 0.0
    %715 = vmatpush1.msra.mxu0 0.0
    %716 = vmatprep.subr.mxu0 0.0
    %717 = vmatpush1.msra.mxu0 0.0
    %718 = vmatprep.subr.mxu0 0.0
    %719 = vmatpush1.msra.mxu0 0.0
    %720 = vmatprep.subr.mxu0 0.0
    %721 = vmatpush1.msra.mxu0 0.0
    %722 = vmatprep.subr.mxu0 0.0
    %723 = vmatpush1.msra.mxu0 0.0
    %724 = vmatprep.subr.mxu0 0.0
    %725 = vmatpush1.msra.mxu0 0.0
    %726 = vmatprep.subr.mxu0 0.0
    %727 = vmatpush1.msra.mxu0 0.0
    %728 = vmatprep.mubr.f32.mxu0 0.0
    %729 = vmatmul.mubr.f32.gmra.mrb[0].mxu0 %v536
    %v730 = vpop.f32.mrb[0].mxu0
    %v731 = vadd.f32 0.0, %v730
    %v732 = vpop.f32.mrb[0].mxu0
    %733 = vmatprep.mubr.f32.mxu0 0.0
    %734 = vmatmul.mubr.f32.gmra.mrb[0].mxu0 %v539
    %v735 = vpop.f32.mrb[0].mxu0
    %v736 = vadd.f32 0.0, %v735
    %v737 = vpop.f32.mrb[0].mxu0
    %738 = vmatprep.mubr.f32.mxu0 0.0
    %739 = vmatmul.mubr.f32.gmra.mrb[0].mxu0 %v542
    %v740 = vpop.f32.mrb[0].mxu0
    %v741 = vadd.f32 0.0, %v740
    %v742 = vpop.f32.mrb[0].mxu0
    %743 = vmatprep.mubr.f32.mxu0 0.0
    %744 = vmatmul.mubr.f32.gmra.mrb[0].mxu0 %v545
    %v745 = vpop.f32.mrb[0].mxu0
    %v746 = vadd.f32 0.0, %v745
    %v747 = vpop.f32.mrb[0].mxu0
    %748 = vmatprep.mubr.f32.mxu0 0.0
    %749 = vmatmul.mubr.f32.gmra.mrb[0].mxu0 %v548
    %v750 = vpop.f32.mrb[0].mxu0
    %v751 = vadd.f32 0.0, %v750
    %v752 = vpop.f32.mrb[0].mxu0
    %753 = vmatprep.mubr.f32.mxu0 0.0
    %754 = vmatmul.mubr.f32.gmra.mrb[0].mxu0 %v551
    %v755 = vpop.f32.mrb[0].mxu0
    %v756 = vadd.f32 0.0, %v755
    %v757 = vpop.f32.mrb[0].mxu0
    %758 = vmatprep.mubr.f32.mxu0 0.0
    %759 = vmatmul.mubr.f32.gmra.mrb[0].mxu0 %v554
    %v760 = vpop.f32.mrb[0].mxu0
    %v761 = vadd.f32 0.0, %v760
    %v762 = vpop.f32.mrb[0].mxu0
    %763 = vmatprep.mubr.f32.mxu0 0.0
    %764 = vmatmul.mubr.f32.gmra.mrb[0].mxu0 %v557
    %v765 = vpop.f32.mrb[0].mxu0
    %v766 = vadd.f32 0.0, %v765
    %v767 = vpop.f32.mrb[0].mxu0
    %768 = vdwg.mxu0
    %769 = vmatprep.subr.mxu0 %v84
    %770 = vmatpush1.msra.mxu0 %v83
    %771 = vmatprep.subr.mxu0 %v87
    %772 = vmatpush1.msra.mxu0 %v86
    %773 = vmatprep.subr.mxu0 %v90
    %774 = vmatpush1.msra.mxu0 %v89
    %775 = vmatprep.subr.mxu0 %v93
    %776 = vmatpush1.msra.mxu0 %v92
    %777 = vmatprep.subr.mxu0 %v96
    %778 = vmatpush1.msra.mxu0 %v95
    %779 = vmatprep.subr.mxu0 %v99
    %780 = vmatpush1.msra.mxu0 %v98
    %781 = vmatprep.subr.mxu0 %v102
    %782 = vmatpush1.msra.mxu0 %v101
    %783 = vmatprep.subr.mxu0 %v105
    %784 = vmatpush1.msra.mxu0 %v104
    %785 = vmatprep.subr.mxu0 %v108
    %786 = vmatpush1.msra.mxu0 %v107
    %787 = vmatprep.subr.mxu0 %v111
    %788 = vmatpush1.msra.mxu0 %v110
    %789 = vmatprep.subr.mxu0 %v114
    %790 = vmatpush1.msra.mxu0 %v113
    %791 = vmatprep.subr.mxu0 %v117
    %792 = vmatpush1.msra.mxu0 %v116
    %793 = vmatprep.subr.mxu0 %v120
    %794 = vmatpush1.msra.mxu0 %v119
    %795 = vmatprep.subr.mxu0 %v123
    %796 = vmatpush1.msra.mxu0 %v122
    %797 = vmatprep.subr.mxu0 %v126
    %798 = vmatpush1.msra.mxu0 %v125
    %799 = vmatprep.subr.mxu0 %v129
    %800 = vmatpush1.msra.mxu0 %v128
    %801 = vmatprep.subr.mxu0 0.0
    %802 = vmatpush1.msra.mxu0 0.0
    %803 = vmatprep.subr.mxu0 0.0
    %804 = vmatpush1.msra.mxu0 0.0
    %805 = vmatprep.subr.mxu0 0.0
    %806 = vmatpush1.msra.mxu0 0.0
    %807 = vmatprep.subr.mxu0 0.0
    %808 = vmatpush1.msra.mxu0 0.0
    %809 = vmatprep.subr.mxu0 0.0
    %810 = vmatpush1.msra.mxu0 0.0
    %811 = vmatprep.subr.mxu0 0.0
    %812 = vmatpush1.msra.mxu0 0.0
    %813 = vmatprep.subr.mxu0 0.0
    %814 = vmatpush1.msra.mxu0 0.0
    %815 = vmatprep.subr.mxu0 0.0
    %816 = vmatpush1.msra.mxu0 0.0
    %817 = vmatprep.subr.mxu0 0.0
    %818 = vmatpush1.msra.mxu0 0.0
    %819 = vmatprep.subr.mxu0 0.0
    %820 = vmatpush1.msra.mxu0 0.0
    %821 = vmatprep.subr.mxu0 0.0
    %822 = vmatpush1.msra.mxu0 0.0
    %823 = vmatprep.subr.mxu0 0.0
    %824 = vmatpush1.msra.mxu0 0.0
    %825 = vmatprep.subr.mxu0 0.0
    %826 = vmatpush1.msra.mxu0 0.0
    %827 = vmatprep.subr.mxu0 0.0
    %828 = vmatpush1.msra.mxu0 0.0
    %829 = vmatprep.subr.mxu0 0.0
    %830 = vmatpush1.msra.mxu0 0.0
    %831 = vmatprep.subr.mxu0 0.0
    %832 = vmatpush1.msra.mxu0 0.0
    %833 = vmatprep.mubr.f32.mxu0 0.0
    %834 = vmatmul.mubr.f32.gmra.mrb[0].mxu0 %v527
    %v835 = vpop.f32.mrb[0].mxu0
    %v836 = vadd.f32 0.0, %v835
    %v837 = vpop.f32.mrb[0].mxu0
    %v838 = vadd.f32 0.0, %v837
    %839 = vmatprep.mubr.f32.mxu0 0.0
    %840 = vmatmul.mubr.f32.gmra.mrb[0].mxu0 %v532
    %v841 = vpop.f32.mrb[0].mxu0
    %v842 = vadd.f32 0.0, %v841
    %v843 = vpop.f32.mrb[0].mxu0
    %v844 = vadd.f32 0.0, %v843
    %845 = vdwg.mxu0
    %846 = vmatprep.subr.mxu0 0.0
    %847 = vmatpush1.msra.mxu0 %v85
    %848 = vmatprep.subr.mxu0 0.0
    %849 = vmatpush1.msra.mxu0 %v88
    %850 = vmatprep.subr.mxu0 0.0
    %851 = vmatpush1.msra.mxu0 %v91
    %852 = vmatprep.subr.mxu0 0.0
    %853 = vmatpush1.msra.mxu0 %v94
    %854 = vmatprep.subr.mxu0 0.0
    %855 = vmatpush1.msra.mxu0 %v97
    %856 = vmatprep.subr.mxu0 0.0
    %857 = vmatpush1.msra.mxu0 %v100
    %858 = vmatprep.subr.mxu0 0.0
    %859 = vmatpush1.msra.mxu0 %v103
    %860 = vmatprep.subr.mxu0 0.0
    %861 = vmatpush1.msra.mxu0 %v106
    %862 = vmatprep.subr.mxu0 0.0
    %863 = vmatpush1.msra.mxu0 %v109
    %864 = vmatprep.subr.mxu0 0.0
    %865 = vmatpush1.msra.mxu0 %v112
    %866 = vmatprep.subr.mxu0 0.0
    %867 = vmatpush1.msra.mxu0 %v115
    %868 = vmatprep.subr.mxu0 0.0
    %869 = vmatpush1.msra.mxu0 %v118
    %870 = vmatprep.subr.mxu0 0.0
    %871 = vmatpush1.msra.mxu0 %v121
    %872 = vmatprep.subr.mxu0 0.0
    %873 = vmatpush1.msra.mxu0 %v124
    %874 = vmatprep.subr.mxu0 0.0
    %875 = vmatpush1.msra.mxu0 %v127
    %876 = vmatprep.subr.mxu0 0.0
    %877 = vmatpush1.msra.mxu0 %v130
    %878 = vmatprep.subr.mxu0 0.0
    %879 = vmatpush1.msra.mxu0 0.0
    %880 = vmatprep.subr.mxu0 0.0
    %881 = vmatpush1.msra.mxu0 0.0
    %882 = vmatprep.subr.mxu0 0.0
    %883 = vmatpush1.msra.mxu0 0.0
    %884 = vmatprep.subr.mxu0 0.0
    %885 = vmatpush1.msra.mxu0 0.0
    %886 = vmatprep.subr.mxu0 0.0
    %887 = vmatpush1.msra.mxu0 0.0
    %888 = vmatprep.subr.mxu0 0.0
    %889 = vmatpush1.msra.mxu0 0.0
    %890 = vmatprep.subr.mxu0 0.0
    %891 = vmatpush1.msra.mxu0 0.0
    %892 = vmatprep.subr.mxu0 0.0
    %893 = vmatpush1.msra.mxu0 0.0
    %894 = vmatprep.subr.mxu0 0.0
    %895 = vmatpush1.msra.mxu0 0.0
    %896 = vmatprep.subr.mxu0 0.0
    %897 = vmatpush1.msra.mxu0 0.0
    %898 = vmatprep.subr.mxu0 0.0
    %899 = vmatpush1.msra.mxu0 0.0
    %900 = vmatprep.subr.mxu0 0.0
    %901 = vmatpush1.msra.mxu0 0.0
    %902 = vmatprep.subr.mxu0 0.0
    %903 = vmatpush1.msra.mxu0 0.0
    %904 = vmatprep.subr.mxu0 0.0
    %905 = vmatpush1.msra.mxu0 0.0
    %906 = vmatprep.subr.mxu0 0.0
    %907 = vmatpush1.msra.mxu0 0.0
    %908 = vmatprep.subr.mxu0 0.0
    %909 = vmatpush1.msra.mxu0 0.0
    %910 = vmatprep.mubr.f32.mxu0 0.0
    %911 = vmatmul.mubr.f32.gmra.mrb[0].mxu0 %v527
    %v912 = vpop.f32.mrb[0].mxu0
    %v913 = vadd.f32 0.0, %v912
    %v914 = vpop.f32.mrb[0].mxu0
    %915 = vmatprep.mubr.f32.mxu0 0.0
    %916 = vmatmul.mubr.f32.gmra.mrb[0].mxu0 %v532
    %v917 = vpop.f32.mrb[0].mxu0
    %v918 = vadd.f32 0.0, %v917
    %v919 = vpop.f32.mrb[0].mxu0
    %920 = vdwg.mxu0
    %v921 = vadd.f32 %v259, %v836
    %v922 = vadd.f32 %v261, %v838
    %v923 = vadd.f32 %v336, %v913
    %v924 = vadd.f32 %v265, %v842
    %v925 = vadd.f32 %v267, %v844
    %v926 = vadd.f32 %v342, %v918
    %v927 = vxor.u32 %v921, 2147483648
    %v928 = vxor.u32 %v924, 2147483648
    %v929 = vmul.f32 %v927, 1.442695
    %v930 = vpow.pop %v929
    %v931 = vmul.f32 %v928, 1.442695
    %v932 = vpow.pop %v931
    %v933 = vadd.f32 %v930, 1.0
    %v934 = vadd.f32 %v932, 1.0
    %v935 = vrcp.pop %v933
    %v936 = vmul.f32 1.0, %v935
    %v937 = vrcp.pop %v934
    %v938 = vmul.f32 1.0, %v937
    %v939 = vxor.u32 %v922, 2147483648
    %v940 = vxor.u32 %v925, 2147483648
    %v941 = vmul.f32 %v939, 1.442695
    %v942 = vpow.pop %v941
    %v943 = vmul.f32 %v940, 1.442695
    %v944 = vpow.pop %v943
    %v945 = vadd.f32 %v942, 1.0
    %v946 = vadd.f32 %v944, 1.0
    %v947 = vrcp.pop %v945
    %v948 = vmul.f32 1.0, %v947
    %v949 = vrcp.pop %v946
    %v950 = vmul.f32 1.0, %v949
    %v951 = vtanh.pop %v923
    %v952 = vtanh.pop %v926
    %v953 = vadd.f32 %v338, %v626
    %v954 = vadd.f32 %v344, %v631
    %v955 = vadd.f32 %v338, %v636
    %v956 = vadd.f32 %v344, %v641
    %v957 = vadd.f32 %v338, %v646
    %v958 = vadd.f32 %v344, %v651
    %v959 = vadd.f32 %v338, %v656
    %v960 = vadd.f32 %v344, %v661
    %v961 = vxor.u32 %v953, 2147483648
    %v962 = vxor.u32 %v954, 2147483648
    %v963 = vxor.u32 %v955, 2147483648
    %v964 = vxor.u32 %v956, 2147483648
    %v965 = vxor.u32 %v957, 2147483648
    %v966 = vxor.u32 %v958, 2147483648
    %v967 = vxor.u32 %v959, 2147483648
    %v968 = vxor.u32 %v960, 2147483648
    %v969 = vmul.f32 %v961, 1.442695
    %v970 = vpow.pop %v969
    %v971 = vmul.f32 %v962, 1.442695
    %v972 = vpow.pop %v971
    %v973 = vmul.f32 %v963, 1.442695
    %v974 = vpow.pop %v973
    %v975 = vmul.f32 %v964, 1.442695
    %v976 = vpow.pop %v975
    %v977 = vmul.f32 %v965, 1.442695
    %v978 = vpow.pop %v977
    %v979 = vmul.f32 %v966, 1.442695
    %v980 = vpow.pop %v979
    %v981 = vmul.f32 %v967, 1.442695
    %v982 = vpow.pop %v981
    %v983 = vmul.f32 %v968, 1.442695
    %v984 = vpow.pop %v983
    %v985 = vadd.f32 %v970, 1.0
    %v986 = vadd.f32 %v972, 1.0
    %v987 = vadd.f32 %v974, 1.0
    %v988 = vadd.f32 %v976, 1.0
    %v989 = vadd.f32 %v978, 1.0
    %v990 = vadd.f32 %v980, 1.0
    %v991 = vadd.f32 %v982, 1.0
    %v992 = vadd.f32 %v984, 1.0
    %v993 = vrcp.pop %v985
    %v994 = vmul.f32 1.0, %v993
    %v995 = vrcp.pop %v986
    %v996 = vmul.f32 1.0, %v995
    %v997 = vrcp.pop %v987
    %v998 = vmul.f32 1.0, %v997
    %v999 = vrcp.pop %v988
    %v1000 = vmul.f32 1.0, %v999
    %v1001 = vrcp.pop %v989
    %v1002 = vmul.f32 1.0, %v1001
    %v1003 = vrcp.pop %v990
    %v1004 = vmul.f32 1.0, %v1003
    %v1005 = vrcp.pop %v991
    %v1006 = vmul.f32 1.0, %v1005
    %v1007 = vrcp.pop %v992
    %v1008 = vmul.f32 1.0, %v1007
    %v1009 = vmul.f32 %v994, %v731
    %v1010 = vmul.f32 %v996, %v736
    %v1011 = vmul.f32 %v998, %v741
    %v1012 = vmul.f32 %v1000, %v746
    %v1013 = vmul.f32 %v1002, %v751
    %v1014 = vmul.f32 %v1004, %v756
    %v1015 = vmul.f32 %v1006, %v761
    %v1016 = vmul.f32 %v1008, %v766
    %v1017 = vadd.f32 %v1009, %v1011
    %v1018 = vadd.f32 %v1010, %v1012
    %v1019 = vadd.f32 %v1017, %v1013
    %v1020 = vadd.f32 %v1018, %v1014
    %v1021 = vadd.f32 %v1019, %v1015
    %v1022 = vadd.f32 %v1020, %v1016
    %v1023 = vmul.f32 %v936, %v951
    %v1024 = vmul.f32 %v938, %v952
    %v1025 = vadd.f32 %v1023, %v1021
    %v1026 = vadd.f32 %v1024, %v1022
    %v1027 = vtanh.pop %v1025
    %v1028 = vtanh.pop %v1026
    %v1029 = vmul.f32 %v948, %v1027
    %v1030 = vmul.f32 %v950, %v1028
    %1031 = vmatprep.subr.mxu0 0.0
    %1032 = vmatpush1.msra.mxu0 %v131
    %1033 = vmatprep.subr.mxu0 0.0
    %1034 = vmatpush1.msra.mxu0 %v132
    %1035 = vmatprep.subr.mxu0 0.0
    %1036 = vmatpush1.msra.mxu0 %v133
    %1037 = vmatprep.subr.mxu0 0.0
    %1038 = vmatpush1.msra.mxu0 %v134
    %1039 = vmatprep.subr.mxu0 0.0
    %1040 = vmatpush1.msra.mxu0 %v135
    %1041 = vmatprep.subr.mxu0 0.0
    %1042 = vmatpush1.msra.mxu0 %v136
    %1043 = vmatprep.subr.mxu0 0.0
    %1044 = vmatpush1.msra.mxu0 %v137
    %1045 = vmatprep.subr.mxu0 0.0
    %1046 = vmatpush1.msra.mxu0 %v138
    %1047 = vmatprep.subr.mxu0 0.0
    %1048 = vmatpush1.msra.mxu0 %v139
    %1049 = vmatprep.subr.mxu0 0.0
    %1050 = vmatpush1.msra.mxu0 %v140
    %1051 = vmatprep.subr.mxu0 0.0
    %1052 = vmatpush1.msra.mxu0 %v141
    %1053 = vmatprep.subr.mxu0 0.0
    %1054 = vmatpush1.msra.mxu0 %v142
    %1055 = vmatprep.subr.mxu0 0.0
    %1056 = vmatpush1.msra.mxu0 %v143
    %1057 = vmatprep.subr.mxu0 0.0
    %1058 = vmatpush1.msra.mxu0 %v144
    %1059 = vmatprep.subr.mxu0 0.0
    %1060 = vmatpush1.msra.mxu0 %v145
    %1061 = vmatprep.subr.mxu0 0.0
    %1062 = vmatpush1.msra.mxu0 %v146
    %1063 = vmatprep.subr.mxu0 0.0
    %1064 = vmatpush1.msra.mxu0 0.0
    %1065 = vmatprep.subr.mxu0 0.0
    %1066 = vmatpush1.msra.mxu0 0.0
    %1067 = vmatprep.subr.mxu0 0.0
    %1068 = vmatpush1.msra.mxu0 0.0
    %1069 = vmatprep.subr.mxu0 0.0
    %1070 = vmatpush1.msra.mxu0 0.0
    %1071 = vmatprep.subr.mxu0 0.0
    %1072 = vmatpush1.msra.mxu0 0.0
    %1073 = vmatprep.subr.mxu0 0.0
    %1074 = vmatpush1.msra.mxu0 0.0
    %1075 = vmatprep.subr.mxu0 0.0
    %1076 = vmatpush1.msra.mxu0 0.0
    %1077 = vmatprep.subr.mxu0 0.0
    %1078 = vmatpush1.msra.mxu0 0.0
    %1079 = vmatprep.subr.mxu0 0.0
    %1080 = vmatpush1.msra.mxu0 0.0
    %1081 = vmatprep.subr.mxu0 0.0
    %1082 = vmatpush1.msra.mxu0 0.0
    %1083 = vmatprep.subr.mxu0 0.0
    %1084 = vmatpush1.msra.mxu0 0.0
    %1085 = vmatprep.subr.mxu0 0.0
    %1086 = vmatpush1.msra.mxu0 0.0
    %1087 = vmatprep.subr.mxu0 0.0
    %1088 = vmatpush1.msra.mxu0 0.0
    %1089 = vmatprep.subr.mxu0 0.0
    %1090 = vmatpush1.msra.mxu0 0.0
    %1091 = vmatprep.subr.mxu0 0.0
    %1092 = vmatpush1.msra.mxu0 0.0
    %1093 = vmatprep.subr.mxu0 0.0
    %1094 = vmatpush1.msra.mxu0 0.0
    %1095 = vmatprep.mubr.f32.mxu0 0.0
    %1096 = vmatmul.mubr.f32.gmra.mrb[0].mxu0 %v1029
    %v1097 = vpop.f32.mrb[0].mxu0
    %v1098 = vadd.f32 0.0, %v1097
    %v1099 = vpop.f32.mrb[0].mxu0
    %1100 = vmatprep.mubr.f32.mxu0 0.0
    %1101 = vmatmul.mubr.f32.gmra.mrb[0].mxu0 %v1030
    %v1102 = vpop.f32.mrb[0].mxu0
    %v1103 = vadd.f32 0.0, %v1102
    %v1104 = vpop.f32.mrb[0].mxu0
    %1105 = vdwg.mxu0
    %1106 = vmatprep.subr.mxu0 0.0
    %1107 = vmatpush1.msra.mxu0 %v1029
    %1108 = vmatprep.subr.mxu0 0.0
    %1109 = vmatpush1.msra.mxu0 %v1030
    %1110 = vmatprep.subr.mxu0 0.0
    %1111 = vmatpush1.msra.mxu0 0.0
    %1112 = vmatprep.subr.mxu0 0.0
    %1113 = vmatpush1.msra.mxu0 0.0
    %1114 = vmatprep.subr.mxu0 0.0
    %1115 = vmatpush1.msra.mxu0 0.0
    %1116 = vmatprep.subr.mxu0 0.0
    %1117 = vmatpush1.msra.mxu0 0.0
    %1118 = vmatprep.subr.mxu0 0.0
    %1119 = vmatpush1.msra.mxu0 0.0
    %1120 = vmatprep.subr.mxu0 0.0
    %1121 = vmatpush1.msra.mxu0 0.0
    %1122 = vmatprep.subr.mxu0 0.0
    %1123 = vmatpush1.msra.mxu0 0.0
    %1124 = vmatprep.subr.mxu0 0.0
    %1125 = vmatpush1.msra.mxu0 0.0
    %1126 = vmatprep.subr.mxu0 0.0
    %1127 = vmatpush1.msra.mxu0 0.0
    %1128 = vmatprep.subr.mxu0 0.0
    %1129 = vmatpush1.msra.mxu0 0.0
    %1130 = vmatprep.subr.mxu0 0.0
    %1131 = vmatpush1.msra.mxu0 0.0
    %1132 = vmatprep.subr.mxu0 0.0
    %1133 = vmatpush1.msra.mxu0 0.0
    %1134 = vmatprep.subr.mxu0 0.0
    %1135 = vmatpush1.msra.mxu0 0.0
    %1136 = vmatprep.subr.mxu0 0.0
    %1137 = vmatpush1.msra.mxu0 0.0
    %1138 = vmatprep.subr.mxu0 0.0
    %1139 = vmatpush1.msra.mxu0 0.0
    %1140 = vmatprep.subr.mxu0 0.0
    %1141 = vmatpush1.msra.mxu0 0.0
    %1142 = vmatprep.subr.mxu0 0.0
    %1143 = vmatpush1.msra.mxu0 0.0
    %1144 = vmatprep.subr.mxu0 0.0
    %1145 = vmatpush1.msra.mxu0 0.0
    %1146 = vmatprep.subr.mxu0 0.0
    %1147 = vmatpush1.msra.mxu0 0.0
    %1148 = vmatprep.subr.mxu0 0.0
    %1149 = vmatpush1.msra.mxu0 0.0
    %1150 = vmatprep.subr.mxu0 0.0
    %1151 = vmatpush1.msra.mxu0 0.0
    %1152 = vmatprep.subr.mxu0 0.0
    %1153 = vmatpush1.msra.mxu0 0.0
    %1154 = vmatprep.subr.mxu0 0.0
    %1155 = vmatpush1.msra.mxu0 0.0
    %1156 = vmatprep.subr.mxu0 0.0
    %1157 = vmatpush1.msra.mxu0 0.0
    %1158 = vmatprep.subr.mxu0 0.0
    %1159 = vmatpush1.msra.mxu0 0.0
    %1160 = vmatprep.subr.mxu0 0.0
    %1161 = vmatpush1.msra.mxu0 0.0
    %1162 = vmatprep.subr.mxu0 0.0
    %1163 = vmatpush1.msra.mxu0 0.0
    %1164 = vmatprep.subr.mxu0 0.0
    %1165 = vmatpush1.msra.mxu0 0.0
    %1166 = vmatprep.subr.mxu0 0.0
    %1167 = vmatpush1.msra.mxu0 0.0
    %1168 = vmatprep.subr.mxu0 0.0
    %1169 = vmatpush1.msra.mxu0 0.0
    %1170 = vmatprep.mubr.f32.mxu0 0.0
    %1171 = vmatmul.mubr.f32.gmra.mrb[0].mxu0 %v455
    %v1172 = vpop.f32.mrb[0].mxu0
    %v1173 = vadd.f32 0.0, %v1172
    %v1174 = vpop.f32.mrb[0].mxu0
    %1175 = vmatprep.mubr.f32.mxu0 0.0
    %1176 = vmatmul.mubr.f32.gmra.mrb[0].mxu0 %v458
    %v1177 = vpop.f32.mrb[0].mxu0
    %v1178 = vadd.f32 0.0, %v1177
    %v1179 = vpop.f32.mrb[0].mxu0
    %1180 = vdwg.mxu0
    %1181 = vmatprep.subr.mxu0 0.0
    %1182 = vmatpush1.msra.mxu0 %v1098
    %1183 = vmatprep.subr.mxu0 0.0
    %1184 = vmatpush1.msra.mxu0 %v1103
    %1185 = vmatprep.subr.mxu0 0.0
    %1186 = vmatpush1.msra.mxu0 0.0
    %1187 = vmatprep.subr.mxu0 0.0
    %1188 = vmatpush1.msra.mxu0 0.0
    %1189 = vmatprep.subr.mxu0 0.0
    %1190 = vmatpush1.msra.mxu0 0.0
    %1191 = vmatprep.subr.mxu0 0.0
    %1192 = vmatpush1.msra.mxu0 0.0
    %1193 = vmatprep.subr.mxu0 0.0
    %1194 = vmatpush1.msra.mxu0 0.0
    %1195 = vmatprep.subr.mxu0 0.0
    %1196 = vmatpush1.msra.mxu0 0.0
    %1197 = vmatprep.subr.mxu0 0.0
    %1198 = vmatpush1.msra.mxu0 0.0
    %1199 = vmatprep.subr.mxu0 0.0
    %1200 = vmatpush1.msra.mxu0 0.0
    %1201 = vmatprep.subr.mxu0 0.0
    %1202 = vmatpush1.msra.mxu0 0.0
    %1203 = vmatprep.subr.mxu0 0.0
    %1204 = vmatpush1.msra.mxu0 0.0
    %1205 = vmatprep.subr.mxu0 0.0
    %1206 = vmatpush1.msra.mxu0 0.0
    %1207 = vmatprep.subr.mxu0 0.0
    %1208 = vmatpush1.msra.mxu0 0.0
    %1209 = vmatprep.subr.mxu0 0.0
    %1210 = vmatpush1.msra.mxu0 0.0
    %1211 = vmatprep.subr.mxu0 0.0
    %1212 = vmatpush1.msra.mxu0 0.0
    %1213 = vmatprep.subr.mxu0 0.0
    %1214 = vmatpush1.msra.mxu0 0.0
    %1215 = vmatprep.subr.mxu0 0.0
    %1216 = vmatpush1.msra.mxu0 0.0
    %1217 = vmatprep.subr.mxu0 0.0
    %1218 = vmatpush1.msra.mxu0 0.0
    %1219 = vmatprep.subr.mxu0 0.0
    %1220 = vmatpush1.msra.mxu0 0.0
    %1221 = vmatprep.subr.mxu0 0.0
    %1222 = vmatpush1.msra.mxu0 0.0
    %1223 = vmatprep.subr.mxu0 0.0
    %1224 = vmatpush1.msra.mxu0 0.0
    %1225 = vmatprep.subr.mxu0 0.0
    %1226 = vmatpush1.msra.mxu0 0.0
    %1227 = vmatprep.subr.mxu0 0.0
    %1228 = vmatpush1.msra.mxu0 0.0
    %1229 = vmatprep.subr.mxu0 0.0
    %1230 = vmatpush1.msra.mxu0 0.0
    %1231 = vmatprep.subr.mxu0 0.0
    %1232 = vmatpush1.msra.mxu0 0.0
    %1233 = vmatprep.subr.mxu0 0.0
    %1234 = vmatpush1.msra.mxu0 0.0
    %1235 = vmatprep.subr.mxu0 0.0
    %1236 = vmatpush1.msra.mxu0 0.0
    %1237 = vmatprep.subr.mxu0 0.0
    %1238 = vmatpush1.msra.mxu0 0.0
    %1239 = vmatprep.subr.mxu0 0.0
    %1240 = vmatpush1.msra.mxu0 0.0
    %1241 = vmatprep.subr.mxu0 0.0
    %1242 = vmatpush1.msra.mxu0 0.0
    %1243 = vmatprep.subr.mxu0 0.0
    %1244 = vmatpush1.msra.mxu0 0.0
    %1245 = vmatprep.mubr.f32.mxu0 0.0
    %1246 = vmatmul.mubr.f32.gmra.mrb[0].mxu0 %v536
    %v1247 = vpop.f32.mrb[0].mxu0
    %v1248 = vadd.f32 0.0, %v1247
    %v1249 = vpop.f32.mrb[0].mxu0
    %1250 = vmatprep.mubr.f32.mxu0 0.0
    %1251 = vmatmul.mubr.f32.gmra.mrb[0].mxu0 %v539
    %v1252 = vpop.f32.mrb[0].mxu0
    %v1253 = vadd.f32 0.0, %v1252
    %v1254 = vpop.f32.mrb[0].mxu0
    %1255 = vmatprep.mubr.f32.mxu0 0.0
    %1256 = vmatmul.mubr.f32.gmra.mrb[0].mxu0 %v542
    %v1257 = vpop.f32.mrb[0].mxu0
    %v1258 = vadd.f32 0.0, %v1257
    %v1259 = vpop.f32.mrb[0].mxu0
    %1260 = vmatprep.mubr.f32.mxu0 0.0
    %1261 = vmatmul.mubr.f32.gmra.mrb[0].mxu0 %v545
    %v1262 = vpop.f32.mrb[0].mxu0
    %v1263 = vadd.f32 0.0, %v1262
    %v1264 = vpop.f32.mrb[0].mxu0
    %1265 = vmatprep.mubr.f32.mxu0 0.0
    %1266 = vmatmul.mubr.f32.gmra.mrb[0].mxu0 %v548
    %v1267 = vpop.f32.mrb[0].mxu0
    %v1268 = vadd.f32 0.0, %v1267
    %v1269 = vpop.f32.mrb[0].mxu0
    %1270 = vmatprep.mubr.f32.mxu0 0.0
    %1271 = vmatmul.mubr.f32.gmra.mrb[0].mxu0 %v551
    %v1272 = vpop.f32.mrb[0].mxu0
    %v1273 = vadd.f32 0.0, %v1272
    %v1274 = vpop.f32.mrb[0].mxu0
    %1275 = vmatprep.mubr.f32.mxu0 0.0
    %1276 = vmatmul.mubr.f32.gmra.mrb[0].mxu0 %v554
    %v1277 = vpop.f32.mrb[0].mxu0
    %v1278 = vadd.f32 0.0, %v1277
    %v1279 = vpop.f32.mrb[0].mxu0
    %1280 = vmatprep.mubr.f32.mxu0 0.0
    %1281 = vmatmul.mubr.f32.gmra.mrb[0].mxu0 %v557
    %v1282 = vpop.f32.mrb[0].mxu0
    %v1283 = vadd.f32 0.0, %v1282
    %v1284 = vpop.f32.mrb[0].mxu0
    %1285 = vdwg.mxu0
    %1286 = vmatprep.subr.mxu0 0.0
    %1287 = vmatpush1.msra.mxu0 %v1025
    %1288 = vmatprep.subr.mxu0 0.0
    %1289 = vmatpush1.msra.mxu0 %v1026
    %1290 = vmatprep.subr.mxu0 0.0
    %1291 = vmatpush1.msra.mxu0 0.0
    %1292 = vmatprep.subr.mxu0 0.0
    %1293 = vmatpush1.msra.mxu0 0.0
    %1294 = vmatprep.subr.mxu0 0.0
    %1295 = vmatpush1.msra.mxu0 0.0
    %1296 = vmatprep.subr.mxu0 0.0
    %1297 = vmatpush1.msra.mxu0 0.0
    %1298 = vmatprep.subr.mxu0 0.0
    %1299 = vmatpush1.msra.mxu0 0.0
    %1300 = vmatprep.subr.mxu0 0.0
    %1301 = vmatpush1.msra.mxu0 0.0
    %1302 = vmatprep.subr.mxu0 0.0
    %1303 = vmatpush1.msra.mxu0 0.0
    %1304 = vmatprep.subr.mxu0 0.0
    %1305 = vmatpush1.msra.mxu0 0.0
    %1306 = vmatprep.subr.mxu0 0.0
    %1307 = vmatpush1.msra.mxu0 0.0
    %1308 = vmatprep.subr.mxu0 0.0
    %1309 = vmatpush1.msra.mxu0 0.0
    %1310 = vmatprep.subr.mxu0 0.0
    %1311 = vmatpush1.msra.mxu0 0.0
    %1312 = vmatprep.subr.mxu0 0.0
    %1313 = vmatpush1.msra.mxu0 0.0
    %1314 = vmatprep.subr.mxu0 0.0
    %1315 = vmatpush1.msra.mxu0 0.0
    %1316 = vmatprep.subr.mxu0 0.0
    %1317 = vmatpush1.msra.mxu0 0.0
    %1318 = vmatprep.subr.mxu0 0.0
    %1319 = vmatpush1.msra.mxu0 0.0
    %1320 = vmatprep.subr.mxu0 0.0
    %1321 = vmatpush1.msra.mxu0 0.0
    %1322 = vmatprep.subr.mxu0 0.0
    %1323 = vmatpush1.msra.mxu0 0.0
    %1324 = vmatprep.subr.mxu0 0.0
    %1325 = vmatpush1.msra.mxu0 0.0
    %1326 = vmatprep.subr.mxu0 0.0
    %1327 = vmatpush1.msra.mxu0 0.0
    %1328 = vmatprep.subr.mxu0 0.0
    %1329 = vmatpush1.msra.mxu0 0.0
    %1330 = vmatprep.subr.mxu0 0.0
    %1331 = vmatpush1.msra.mxu0 0.0
    %1332 = vmatprep.subr.mxu0 0.0
    %1333 = vmatpush1.msra.mxu0 0.0
    %1334 = vmatprep.subr.mxu0 0.0
    %1335 = vmatpush1.msra.mxu0 0.0
    %1336 = vmatprep.subr.mxu0 0.0
    %1337 = vmatpush1.msra.mxu0 0.0
    %1338 = vmatprep.subr.mxu0 0.0
    %1339 = vmatpush1.msra.mxu0 0.0
    %1340 = vmatprep.subr.mxu0 0.0
    %1341 = vmatpush1.msra.mxu0 0.0
    %1342 = vmatprep.subr.mxu0 0.0
    %1343 = vmatpush1.msra.mxu0 0.0
    %1344 = vmatprep.subr.mxu0 0.0
    %1345 = vmatpush1.msra.mxu0 0.0
    %1346 = vmatprep.subr.mxu0 0.0
    %1347 = vmatpush1.msra.mxu0 0.0
    %1348 = vmatprep.subr.mxu0 0.0
    %1349 = vmatpush1.msra.mxu0 0.0
    %1350 = vmatprep.mubr.f32.mxu0 0.0
    %1351 = vmatmul.mubr.f32.gmra.mrb[0].mxu0 %v536
    %v1352 = vpop.f32.mrb[0].mxu0
    %v1353 = vadd.f32 0.0, %v1352
    %v1354 = vpop.f32.mrb[0].mxu0
    %1355 = vmatprep.mubr.f32.mxu0 0.0
    %1356 = vmatmul.mubr.f32.gmra.mrb[0].mxu0 %v539
    %v1357 = vpop.f32.mrb[0].mxu0
    %v1358 = vadd.f32 0.0, %v1357
    %v1359 = vpop.f32.mrb[0].mxu0
    %1360 = vmatprep.mubr.f32.mxu0 0.0
    %1361 = vmatmul.mubr.f32.gmra.mrb[0].mxu0 %v542
    %v1362 = vpop.f32.mrb[0].mxu0
    %v1363 = vadd.f32 0.0, %v1362
    %v1364 = vpop.f32.mrb[0].mxu0
    %1365 = vmatprep.mubr.f32.mxu0 0.0
    %1366 = vmatmul.mubr.f32.gmra.mrb[0].mxu0 %v545
    %v1367 = vpop.f32.mrb[0].mxu0
    %v1368 = vadd.f32 0.0, %v1367
    %v1369 = vpop.f32.mrb[0].mxu0
    %1370 = vmatprep.mubr.f32.mxu0 0.0
    %1371 = vmatmul.mubr.f32.gmra.mrb[0].mxu0 %v548
    %v1372 = vpop.f32.mrb[0].mxu0
    %v1373 = vadd.f32 0.0, %v1372
    %v1374 = vpop.f32.mrb[0].mxu0
    %1375 = vmatprep.mubr.f32.mxu0 0.0
    %1376 = vmatmul.mubr.f32.gmra.mrb[0].mxu0 %v551
    %v1377 = vpop.f32.mrb[0].mxu0
    %v1378 = vadd.f32 0.0, %v1377
    %v1379 = vpop.f32.mrb[0].mxu0
    %1380 = vmatprep.mubr.f32.mxu0 0.0
    %1381 = vmatmul.mubr.f32.gmra.mrb[0].mxu0 %v554
    %v1382 = vpop.f32.mrb[0].mxu0
    %v1383 = vadd.f32 0.0, %v1382
    %v1384 = vpop.f32.mrb[0].mxu0
    %1385 = vmatprep.mubr.f32.mxu0 0.0
    %1386 = vmatmul.mubr.f32.gmra.mrb[0].mxu0 %v557
    %v1387 = vpop.f32.mrb[0].mxu0
    %v1388 = vadd.f32 0.0, %v1387
    %v1389 = vpop.f32.mrb[0].mxu0
    %1390 = vdwg.mxu0
    %1391 = vmatprep.subr.mxu0 %v84
    %1392 = vmatpush1.msra.mxu0 %v83
    %1393 = vmatprep.subr.mxu0 %v87
    %1394 = vmatpush1.msra.mxu0 %v86
    %1395 = vmatprep.subr.mxu0 %v90
    %1396 = vmatpush1.msra.mxu0 %v89
    %1397 = vmatprep.subr.mxu0 %v93
    %1398 = vmatpush1.msra.mxu0 %v92
    %1399 = vmatprep.subr.mxu0 %v96
    %1400 = vmatpush1.msra.mxu0 %v95
    %1401 = vmatprep.subr.mxu0 %v99
    %1402 = vmatpush1.msra.mxu0 %v98
    %1403 = vmatprep.subr.mxu0 %v102
    %1404 = vmatpush1.msra.mxu0 %v101
    %1405 = vmatprep.subr.mxu0 %v105
    %1406 = vmatpush1.msra.mxu0 %v104
    %1407 = vmatprep.subr.mxu0 %v108
    %1408 = vmatpush1.msra.mxu0 %v107
    %1409 = vmatprep.subr.mxu0 %v111
    %1410 = vmatpush1.msra.mxu0 %v110
    %1411 = vmatprep.subr.mxu0 %v114
    %1412 = vmatpush1.msra.mxu0 %v113
    %1413 = vmatprep.subr.mxu0 %v117
    %1414 = vmatpush1.msra.mxu0 %v116
    %1415 = vmatprep.subr.mxu0 %v120
    %1416 = vmatpush1.msra.mxu0 %v119
    %1417 = vmatprep.subr.mxu0 %v123
    %1418 = vmatpush1.msra.mxu0 %v122
    %1419 = vmatprep.subr.mxu0 %v126
    %1420 = vmatpush1.msra.mxu0 %v125
    %1421 = vmatprep.subr.mxu0 %v129
    %1422 = vmatpush1.msra.mxu0 %v128
    %1423 = vmatprep.subr.mxu0 0.0
    %1424 = vmatpush1.msra.mxu0 0.0
    %1425 = vmatprep.subr.mxu0 0.0
    %1426 = vmatpush1.msra.mxu0 0.0
    %1427 = vmatprep.subr.mxu0 0.0
    %1428 = vmatpush1.msra.mxu0 0.0
    %1429 = vmatprep.subr.mxu0 0.0
    %1430 = vmatpush1.msra.mxu0 0.0
    %1431 = vmatprep.subr.mxu0 0.0
    %1432 = vmatpush1.msra.mxu0 0.0
    %1433 = vmatprep.subr.mxu0 0.0
    %1434 = vmatpush1.msra.mxu0 0.0
    %1435 = vmatprep.subr.mxu0 0.0
    %1436 = vmatpush1.msra.mxu0 0.0
    %1437 = vmatprep.subr.mxu0 0.0
    %1438 = vmatpush1.msra.mxu0 0.0
    %1439 = vmatprep.subr.mxu0 0.0
    %1440 = vmatpush1.msra.mxu0 0.0
    %1441 = vmatprep.subr.mxu0 0.0
    %1442 = vmatpush1.msra.mxu0 0.0
    %1443 = vmatprep.subr.mxu0 0.0
    %1444 = vmatpush1.msra.mxu0 0.0
    %1445 = vmatprep.subr.mxu0 0.0
    %1446 = vmatpush1.msra.mxu0 0.0
    %1447 = vmatprep.subr.mxu0 0.0
    %1448 = vmatpush1.msra.mxu0 0.0
    %1449 = vmatprep.subr.mxu0 0.0
    %1450 = vmatpush1.msra.mxu0 0.0
    %1451 = vmatprep.subr.mxu0 0.0
    %1452 = vmatpush1.msra.mxu0 0.0
    %1453 = vmatprep.subr.mxu0 0.0
    %1454 = vmatpush1.msra.mxu0 0.0
    %1455 = vmatprep.mubr.f32.mxu0 0.0
    %1456 = vmatmul.mubr.f32.gmra.mrb[0].mxu0 %v1173
    %v1457 = vpop.f32.mrb[0].mxu0
    %v1458 = vadd.f32 0.0, %v1457
    %v1459 = vpop.f32.mrb[0].mxu0
    %v1460 = vadd.f32 0.0, %v1459
    %1461 = vmatprep.mubr.f32.mxu0 0.0
    %1462 = vmatmul.mubr.f32.gmra.mrb[0].mxu0 %v1178
    %v1463 = vpop.f32.mrb[0].mxu0
    %v1464 = vadd.f32 0.0, %v1463
    %v1465 = vpop.f32.mrb[0].mxu0
    %v1466 = vadd.f32 0.0, %v1465
    %1467 = vdwg.mxu0
    %1468 = vmatprep.subr.mxu0 0.0
    %1469 = vmatpush1.msra.mxu0 %v85
    %1470 = vmatprep.subr.mxu0 0.0
    %1471 = vmatpush1.msra.mxu0 %v88
    %1472 = vmatprep.subr.mxu0 0.0
    %1473 = vmatpush1.msra.mxu0 %v91
    %1474 = vmatprep.subr.mxu0 0.0
    %1475 = vmatpush1.msra.mxu0 %v94
    %1476 = vmatprep.subr.mxu0 0.0
    %1477 = vmatpush1.msra.mxu0 %v97
    %1478 = vmatprep.subr.mxu0 0.0
    %1479 = vmatpush1.msra.mxu0 %v100
    %1480 = vmatprep.subr.mxu0 0.0
    %1481 = vmatpush1.msra.mxu0 %v103
    %1482 = vmatprep.subr.mxu0 0.0
    %1483 = vmatpush1.msra.mxu0 %v106
    %1484 = vmatprep.subr.mxu0 0.0
    %1485 = vmatpush1.msra.mxu0 %v109
    %1486 = vmatprep.subr.mxu0 0.0
    %1487 = vmatpush1.msra.mxu0 %v112
    %1488 = vmatprep.subr.mxu0 0.0
    %1489 = vmatpush1.msra.mxu0 %v115
    %1490 = vmatprep.subr.mxu0 0.0
    %1491 = vmatpush1.msra.mxu0 %v118
    %1492 = vmatprep.subr.mxu0 0.0
    %1493 = vmatpush1.msra.mxu0 %v121
    %1494 = vmatprep.subr.mxu0 0.0
    %1495 = vmatpush1.msra.mxu0 %v124
    %1496 = vmatprep.subr.mxu0 0.0
    %1497 = vmatpush1.msra.mxu0 %v127
    %1498 = vmatprep.subr.mxu0 0.0
    %1499 = vmatpush1.msra.mxu0 %v130
    %1500 = vmatprep.subr.mxu0 0.0
    %1501 = vmatpush1.msra.mxu0 0.0
    %1502 = vmatprep.subr.mxu0 0.0
    %1503 = vmatpush1.msra.mxu0 0.0
    %1504 = vmatprep.subr.mxu0 0.0
    %1505 = vmatpush1.msra.mxu0 0.0
    %1506 = vmatprep.subr.mxu0 0.0
    %1507 = vmatpush1.msra.mxu0 0.0
    %1508 = vmatprep.subr.mxu0 0.0
    %1509 = vmatpush1.msra.mxu0 0.0
    %1510 = vmatprep.subr.mxu0 0.0
    %1511 = vmatpush1.msra.mxu0 0.0
    %1512 = vmatprep.subr.mxu0 0.0
    %1513 = vmatpush1.msra.mxu0 0.0
    %1514 = vmatprep.subr.mxu0 0.0
    %1515 = vmatpush1.msra.mxu0 0.0
    %1516 = vmatprep.subr.mxu0 0.0
    %1517 = vmatpush1.msra.mxu0 0.0
    %1518 = vmatprep.subr.mxu0 0.0
    %1519 = vmatpush1.msra.mxu0 0.0
    %1520 = vmatprep.subr.mxu0 0.0
    %1521 = vmatpush1.msra.mxu0 0.0
    %1522 = vmatprep.subr.mxu0 0.0
    %1523 = vmatpush1.msra.mxu0 0.0
    %1524 = vmatprep.subr.mxu0 0.0
    %1525 = vmatpush1.msra.mxu0 0.0
    %1526 = vmatprep.subr.mxu0 0.0
    %1527 = vmatpush1.msra.mxu0 0.0
    %1528 = vmatprep.subr.mxu0 0.0
    %1529 = vmatpush1.msra.mxu0 0.0
    %1530 = vmatprep.subr.mxu0 0.0
    %1531 = vmatpush1.msra.mxu0 0.0
    %1532 = vmatprep.mubr.f32.mxu0 0.0
    %1533 = vmatmul.mubr.f32.gmra.mrb[0].mxu0 %v1173
    %v1534 = vpop.f32.mrb[0].mxu0
    %v1535 = vadd.f32 0.0, %v1534
    %v1536 = vpop.f32.mrb[0].mxu0
    %1537 = vmatprep.mubr.f32.mxu0 0.0
    %1538 = vmatmul.mubr.f32.gmra.mrb[0].mxu0 %v1178
    %v1539 = vpop.f32.mrb[0].mxu0
    %v1540 = vadd.f32 0.0, %v1539
    %v1541 = vpop.f32.mrb[0].mxu0
    %1542 = vdwg.mxu0
    %v1543 = vadd.f32 %v259, %v1458
    %v1544 = vadd.f32 %v261, %v1460
    %v1545 = vadd.f32 %v336, %v1535
    %v1546 = vadd.f32 %v265, %v1464
    %v1547 = vadd.f32 %v267, %v1466
    %v1548 = vadd.f32 %v342, %v1540
    %v1549 = vxor.u32 %v1543, 2147483648
    %v1550 = vxor.u32 %v1546, 2147483648
    %v1551 = vmul.f32 %v1549, 1.442695
    %v1552 = vpow.pop %v1551
    %v1553 = vmul.f32 %v1550, 1.442695
    %v1554 = vpow.pop %v1553
    %v1555 = vadd.f32 %v1552, 1.0
    %v1556 = vadd.f32 %v1554, 1.0
    %v1557 = vrcp.pop %v1555
    %v1558 = vmul.f32 1.0, %v1557
    %v1559 = vrcp.pop %v1556
    %v1560 = vmul.f32 1.0, %v1559
    %v1561 = vxor.u32 %v1544, 2147483648
    %v1562 = vxor.u32 %v1547, 2147483648
    %v1563 = vmul.f32 %v1561, 1.442695
    %v1564 = vpow.pop %v1563
    %v1565 = vmul.f32 %v1562, 1.442695
    %v1566 = vpow.pop %v1565
    %v1567 = vadd.f32 %v1564, 1.0
    %v1568 = vadd.f32 %v1566, 1.0
    %v1569 = vrcp.pop %v1567
    %v1570 = vmul.f32 1.0, %v1569
    %v1571 = vrcp.pop %v1568
    %v1572 = vmul.f32 1.0, %v1571
    %v1573 = vtanh.pop %v1545
    %v1574 = vtanh.pop %v1548
    %v1575 = vadd.f32 %v338, %v1248
    %v1576 = vadd.f32 %v344, %v1253
    %v1577 = vadd.f32 %v338, %v1258
    %v1578 = vadd.f32 %v344, %v1263
    %v1579 = vadd.f32 %v338, %v1268
    %v1580 = vadd.f32 %v344, %v1273
    %v1581 = vadd.f32 %v338, %v1278
    %v1582 = vadd.f32 %v344, %v1283
    %v1583 = vxor.u32 %v1575, 2147483648
    %v1584 = vxor.u32 %v1576, 2147483648
    %v1585 = vxor.u32 %v1577, 2147483648
    %v1586 = vxor.u32 %v1578, 2147483648
    %v1587 = vxor.u32 %v1579, 2147483648
    %v1588 = vxor.u32 %v1580, 2147483648
    %v1589 = vxor.u32 %v1581, 2147483648
    %v1590 = vxor.u32 %v1582, 2147483648
    %v1591 = vmul.f32 %v1583, 1.442695
    %v1592 = vpow.pop %v1591
    %v1593 = vmul.f32 %v1584, 1.442695
    %v1594 = vpow.pop %v1593
    %v1595 = vmul.f32 %v1585, 1.442695
    %v1596 = vpow.pop %v1595
    %v1597 = vmul.f32 %v1586, 1.442695
    %v1598 = vpow.pop %v1597
    %v1599 = vmul.f32 %v1587, 1.442695
    %v1600 = vpow.pop %v1599
    %v1601 = vmul.f32 %v1588, 1.442695
    %v1602 = vpow.pop %v1601
    %v1603 = vmul.f32 %v1589, 1.442695
    %v1604 = vpow.pop %v1603
    %v1605 = vmul.f32 %v1590, 1.442695
    %v1606 = vpow.pop %v1605
    %v1607 = vadd.f32 %v1592, 1.0
    %v1608 = vadd.f32 %v1594, 1.0
    %v1609 = vadd.f32 %v1596, 1.0
    %v1610 = vadd.f32 %v1598, 1.0
    %v1611 = vadd.f32 %v1600, 1.0
    %v1612 = vadd.f32 %v1602, 1.0
    %v1613 = vadd.f32 %v1604, 1.0
    %v1614 = vadd.f32 %v1606, 1.0
    %v1615 = vrcp.pop %v1607
    %v1616 = vmul.f32 1.0, %v1615
    %v1617 = vrcp.pop %v1608
    %v1618 = vmul.f32 1.0, %v1617
    %v1619 = vrcp.pop %v1609
    %v1620 = vmul.f32 1.0, %v1619
    %v1621 = vrcp.pop %v1610
    %v1622 = vmul.f32 1.0, %v1621
    %v1623 = vrcp.pop %v1611
    %v1624 = vmul.f32 1.0, %v1623
    %v1625 = vrcp.pop %v1612
    %v1626 = vmul.f32 1.0, %v1625
    %v1627 = vrcp.pop %v1613
    %v1628 = vmul.f32 1.0, %v1627
    %v1629 = vrcp.pop %v1614
    %v1630 = vmul.f32 1.0, %v1629
    %v1631 = vmul.f32 %v1616, %v1353
    %v1632 = vmul.f32 %v1618, %v1358
    %v1633 = vmul.f32 %v1620, %v1363
    %v1634 = vmul.f32 %v1622, %v1368
    %v1635 = vmul.f32 %v1624, %v1373
    %v1636 = vmul.f32 %v1626, %v1378
    %v1637 = vmul.f32 %v1628, %v1383
    %v1638 = vmul.f32 %v1630, %v1388
    %v1639 = vadd.f32 %v1631, %v1633
    %v1640 = vadd.f32 %v1632, %v1634
    %v1641 = vadd.f32 %v1639, %v1635
    %v1642 = vadd.f32 %v1640, %v1636
    %v1643 = vadd.f32 %v1641, %v1637
    %v1644 = vadd.f32 %v1642, %v1638
    %v1645 = vmul.f32 %v1558, %v1573
    %v1646 = vmul.f32 %v1560, %v1574
    %v1647 = vadd.f32 %v1645, %v1643
    %v1648 = vadd.f32 %v1646, %v1644
    %v1649 = vtanh.pop %v1647
    %v1650 = vtanh.pop %v1648
    %v1651 = vmul.f32 %v1570, %v1649
    %v1652 = vmul.f32 %v1572, %v1650
    %v1653 = vlaneseq
    %v1654 = vshrl.u32 %v1653, 7
    %v1655 = vadd.s32 %v1654, 8
    %vm1656 = vcmp.ne.s32.totalorder %v1654, 0
    %vm1657 = vcmp.ne.s32.totalorder %v1655, 0
    %v1658 = vsel %vm1656, 1, 0
    %v1659 = vsel %vm1657, 1, 0
    %v1660 = vcvt.s32.f32 %v1658
    %v1661 = vcvt.s32.f32 %v1659
    %v1662 = vmul.f32 %v1651, %v1660
    %v1663 = vmul.f32 %v1652, %v1661
    %1664 = vst [vmem:[#allocation8] sm:$0xff] %v1662
    %1665 = vst [vmem:[#allocation8 + $0x8] sm:$0xff] %v1663
    %v1666 = vmul.f32 %v1647, %v1660
    %v1667 = vmul.f32 %v1648, %v1661
    %1668 = vst [vmem:[#allocation9] sm:$0xff] %v1666
    %1669 = vst [vmem:[#allocation9 + $0x8] sm:$0xff] %v1667
    // Predicated region
    $region42: #{tpu_custom_call.1} parent=1 // pred_check
      _
    $region43: #{tpu_custom_call.1} parent=1 // pred_check_branch
      %1671 = sbr.rel (0) target = $region45
    $region44: #{tpu_custom_call.1} parent=1 // pred_region
      %s1673 = ssub.s32 256, 256
      %1674 = vsyncadd [#allocation4], %s1673
      %s1675 = sshll.u32 [#allocation8], 4
      %s1676 = int_to_ptr.vmem [resolvable:$true] %s1675
      %1681 = dma.vmem_to_hbm [thread:$0]  %s1676, 256, %s7, [#allocation4], 128, 128, 8
    $region45: #{tpu_custom_call.1} parent=1 // pred_fallthru
      _
    // Predicated region
    $region46: #{tpu_custom_call.1} parent=1 // pred_check
      _
    $region47: #{tpu_custom_call.1} parent=1 // pred_check_branch
      %1683 = sbr.rel (0) target = $region49
    $region48: #{tpu_custom_call.1} parent=1 // pred_region
      %s1685 = ssub.s32 256, 256
      %1686 = vsyncadd [#allocation10], %s1685
      %s1687 = sshll.u32 [#allocation9], 4
      %s1688 = int_to_ptr.vmem [resolvable:$true] %s1687
      %1693 = dma.vmem_to_hbm [thread:$0]  %s1688, 256, %s8, [#allocation10], 128, 128, 8
    $region49: #{tpu_custom_call.1} parent=1 // pred_fallthru
      _
    // Predicated region
    $region50: #{tpu_custom_call.1} parent=1 // pred_check
      _
    $region51: #{tpu_custom_call.1} parent=1 // pred_check_branch
      %1695 = sbr.rel (0) target = $region53
    $region52: #{tpu_custom_call.1} parent=1 // pred_region
      %1696 = dma.done [#allocation4], 256
    $region53: #{tpu_custom_call.1} parent=1 // pred_fallthru
      _
    // Predicated region
    $region54: #{tpu_custom_call.1} parent=1 // pred_check
      _
    $region55: #{tpu_custom_call.1} parent=1 // pred_check_branch
      %1698 = sbr.rel (0) target = $region57
    $region56: #{tpu_custom_call.1} parent=1 // pred_region
      %1699 = dma.done [#allocation10], 256
    $region57: #{tpu_custom_call.1} parent=1 // pred_fallthru
      _
    %1700 = vsyncpa [#allocation3], 1
    %1701 = vsyncpa [#allocation6], 1
    %1702 = vsyncpa [#allocation4], 1
    %1703 = vsyncpa [#allocation10], 1

</llo_original>
